<compile_context>
chip_gen: v7x
topology: tpu7x:2x2x1
jax: 0.10.0
libtpu: 0.0.40
codegen_flags: <defaults>
</compile_context>

<pallas_src>
import math
from functools import partial

import jax
import jax.numpy as jnp
from jax.experimental import pallas as pl
from jax.experimental.pallas import tpu as pltpu

# ---- small DistilBERT-like config ----
VOCAB = 128
MAX_POS = 32
HIDDEN = 32
N_HEADS = 2
HEAD_DIM = HIDDEN // N_HEADS
FFN = 64
N_LAYERS = 2
NUM_LABELS = 5
CLS_PAD = 128          # lane-padded classifier width (>= NUM_LABELS, 128-lane dense)
LN_EPS = 1e-12

# ---- packed-parameter layout -------------------------------------------------
# One (N_VEC_ROWS, 128) slab holds every bias / LayerNorm vector and the
# lane-padded classifier weight; one (L*H, 192) slab holds [qkv_w | o_w | ffn1_w]
# per layer; ffn2_w is its own (L*F, H) slab.
VEC_W = CLS_PAD
ROW_EMB_G = 0
ROW_EMB_B = 1
ROW_LAYER0 = 2
ROWS_PER_LAYER = 8                    # qkv_b, o_b, sa_g, sa_b, f1_b, f2_b, out_g, out_b
ROW_CLS_B = ROW_LAYER0 + ROWS_PER_LAYER * N_LAYERS            # 18
ROW_CLS_W = ((ROW_CLS_B + 1 + 7) // 8) * 8                    # 24 (8-row aligned block)
N_VEC_ROWS = ROW_CLS_W + HIDDEN                               # 56

W_QKV0 = 0
W_O0 = 3 * HIDDEN                     # 96
W_F10 = 4 * HIDDEN                    # 128
W_SLAB_COLS = 4 * HIDDEN + FFN        # 192


# ---------------------------------------------------------------------------
# The single fused kernel
# ---------------------------------------------------------------------------
def _layernorm(x, g, b):
    # One-pass LN: E[x] and E[x^2] are independent reductions and can co-issue.
    mean = jnp.mean(x, axis=-1, keepdims=True)
    mean_sq = jnp.mean(x * x, axis=-1, keepdims=True)
    var = mean_sq - mean * mean
    return (x - mean) * jax.lax.rsqrt(var + LN_EPS) * g + b


def _fused_forward_kernel(*refs, with_loss, B, S):
    if with_loss:
        x_ref, mask_ref, vec_ref, w_ref, f2_ref, labels_ref, logits_ref = refs
    else:
        x_ref, mask_ref, vec_ref, w_ref, f2_ref, logits_ref = refs

    H, Dh, Nh, F = HIDDEN, HEAD_DIM, N_HEADS, FFN

    # Embedding LayerNorm (dropout = identity in eval mode).
    x = _layernorm(x_ref[...],
                   vec_ref[ROW_EMB_G:ROW_EMB_G + 1, 0:H],
                   vec_ref[ROW_EMB_B:ROW_EMB_B + 1, 0:H])        # (B*S, H)

    # Precomputed additive mask for the merged (batch, head)-block-diagonal
    # attention; rows/cols are in (b, h, s) order, off-block entries and
    # padded keys are -1e30, everything else 0.
    attn_mask = mask_ref[...]                                    # (B*Nh*S, B*Nh*S)

    for l in range(N_LAYERS):
        r0 = ROW_LAYER0 + ROWS_PER_LAYER * l
        qkv_b = vec_ref[r0 + 0:r0 + 1, 0:3 * H]
        o_b = vec_ref[r0 + 1:r0 + 2, 0:H]
        sa_g = vec_ref[r0 + 2:r0 + 3, 0:H]
        sa_b = vec_ref[r0 + 3:r0 + 4, 0:H]
        f1_b = vec_ref[r0 + 4:r0 + 5, 0:F]
        f2_b = vec_ref[r0 + 5:r0 + 6, 0:H]
        out_g = vec_ref[r0 + 6:r0 + 7, 0:H]
        out_b = vec_ref[r0 + 7:r0 + 8, 0:H]

        w0 = l * H
        qkv_w = w_ref[w0:w0 + H, W_QKV0:W_O0]        # (H, 3H) head-major, Q pre-scaled
        o_w = w_ref[w0:w0 + H, W_O0:W_F10]           # (H, H)
        f1_w = w_ref[w0:w0 + H, W_F10:W_SLAB_COLS]   # (H, F)
        f2_w = f2_ref[l * F:(l + 1) * F, :]          # (F, H)

        # ---- fused Q/K/V projection over all tokens ----
        qkv = jnp.dot(x, qkv_w, preferred_element_type=jnp.float32) + qkv_b  # (B*S, 3H)

        # ---- stack heads along rows: (B*Nh*S, 3*Dh), rows in (b, h, s) order ----
        blocks = []
        for b in range(B):
            for h in range(Nh):
                blocks.append(qkv[b * S:(b + 1) * S, h * 3 * Dh:(h + 1) * 3 * Dh])
        qkv_stack = jnp.concatenate(blocks, axis=0)              # (B*Nh*S, 3*Dh)
        q = qkv_stack[:, 0:Dh]
        k = qkv_stack[:, Dh:2 * Dh]
        v = qkv_stack[:, 2 * Dh:3 * Dh]

        # ---- ONE block-diagonal scores matmul + ONE softmax + ONE PV matmul ----
        scores = jax.lax.dot_general(q, k, (((1,), (1,)), ((), ())),
                                     preferred_element_type=jnp.float32)  # (BNhS, BNhS)
        scores = scores + attn_mask
        m = jnp.max(scores, axis=-1, keepdims=True)
        p = jnp.exp(scores - m)
        p = p * pl.reciprocal(jnp.sum(p, axis=-1, keepdims=True), approx=True)
        ctx_stack = jnp.dot(p, v, preferred_element_type=jnp.float32)     # (BNhS, Dh)

        # ---- reassemble (b, h, s) rows -> (B*S, H) head-major lanes, in registers ----
        per_batch = []
        for b in range(B):
            heads = [ctx_stack[(b * Nh + h) * S:(b * Nh + h + 1) * S, :]
                     for h in range(Nh)]
            per_batch.append(jnp.concatenate(heads, axis=1))     # (S, H)
        ctx = jnp.concatenate(per_batch, axis=0)                 # (B*S, H)

        # ---- output projection + residual + LayerNorm ----
        sa = jnp.dot(ctx, o_w, preferred_element_type=jnp.float32) + o_b
        x = _layernorm(sa + x, sa_g, sa_b)

        # ---- FFN (+ GELU epilogue) + residual + LayerNorm ----
        h1 = jnp.dot(x, f1_w, preferred_element_type=jnp.float32) + f1_b
        # TODO(synk): HF DistilBERT uses exact (erf) GELU; tanh approximation here.
        h1 = jax.nn.gelu(h1, approximate=True)
        h2 = jnp.dot(h1, f2_w, preferred_element_type=jnp.float32) + f2_b
        x = _layernorm(h2 + x, out_g, out_b)

    # ---- classifier, lane-padded to CLS_PAD lanes (unmasked 128-lane stores) ----
    cls_w = vec_ref[ROW_CLS_W:ROW_CLS_W + H, :]                  # (H, CLS_PAD)
    cls_b = vec_ref[ROW_CLS_B:ROW_CLS_B + 1, :]                  # (1, CLS_PAD)
    logits = jnp.dot(x, cls_w, preferred_element_type=jnp.float32) + cls_b   # (B*S, 128)

    # ---- fused cross-entropy epilogue; scalar loss stashed in a spare pad lane ----
    if with_loss:
        labels = labels_ref[...]                                 # (B*S, 1) int32, -100 = ignore
        col = jax.lax.broadcasted_iota(jnp.int32, logits.shape, 1)
        masked = jnp.where(col < NUM_LABELS, logits, -1e30)      # kill pad lanes
        m = jnp.max(masked, axis=-1, keepdims=True)
        lse = jnp.log(jnp.sum(jnp.exp(masked - m), axis=-1, keepdims=True)) + m
        picked = jnp.sum(jnp.where(col == labels, masked, 0.0), axis=-1, keepdims=True)
        valid = labels != -100
        per_tok = jnp.where(valid, lse - picked, 0.0)            # (B*S, 1)
        n_valid = jnp.sum(valid.astype(jnp.float32), axis=0, keepdims=True)   # (1, 1)
        loss = jnp.sum(per_tok, axis=0, keepdims=True) / jnp.maximum(n_valid, 1.0)
        row = jax.lax.broadcasted_iota(jnp.int32, logits.shape, 0)
        # stash the scalar loss at [0, NUM_LABELS] (an unused pad lane)
        logits = jnp.where((row == 0) & (col == NUM_LABELS), loss, logits)

    logits_ref[...] = logits


def _full_block(shape):
    nd = len(shape)
    return pl.BlockSpec(shape, lambda i, _nd=nd: (0,) * _nd)


def _fused_forward(params, x_emb, mask_full, labels, B, S):
    with_loss = labels is not None
    args = [x_emb, mask_full, params["vecs"], params["w_slab"], params["ffn2_w"]]
    if with_loss:
        args.append(labels.reshape(B * S, 1).astype(jnp.int32))

    in_specs = [_full_block(a.shape) for a in args]

    return pl.pallas_call(
        partial(_fused_forward_kernel, with_loss=with_loss, B=B, S=S),
        out_shape=jax.ShapeDtypeStruct((B * S, CLS_PAD), jnp.float32),
        grid=(1,),
        in_specs=in_specs,
        out_specs=_full_block((B * S, CLS_PAD)),
        compiler_params=pltpu.CompilerParams(
            dimension_semantics=("arbitrary",),
            vmem_limit_bytes=8 * 1024 * 1024,
        ),
    )(*args)


# ---------------------------------------------------------------------------
# Model glue: parameter init (packed layout) and embedding gather
# ---------------------------------------------------------------------------
def init_params(key):
    ks = jax.random.split(key, 8)

    def w(k, shape):
        return 0.02 * jax.random.normal(k, shape, dtype=jnp.float32)

    L, H, F, Dh = N_LAYERS, HIDDEN, FFN, HEAD_DIM
    scale = 1.0 / math.sqrt(Dh)

    # Raw weights in the standard [Q | K | V] column layout.
    qkv_w_std = w(ks[2], (L, H, 3 * H))
    qkv_b_std = jnp.zeros((L, 3 * H), jnp.float32)

    def to_head_major(m):
        # (..., 3H) std [Q|K|V] -> (..., 3H) head-major [q_h|k_h|v_h]; fold the
        # 1/sqrt(HEAD_DIM) softmax scale into the Q columns.
        parts = []
        for h in range(N_HEADS):
            parts.append(m[..., h * Dh:(h + 1) * Dh] * scale)                 # q_h
            parts.append(m[..., H + h * Dh:H + (h + 1) * Dh])                 # k_h
            parts.append(m[..., 2 * H + h * Dh:2 * H + (h + 1) * Dh])         # v_h
        return jnp.concatenate(parts, axis=-1)

    qkv_w = to_head_major(qkv_w_std)              # (L, H, 3H)
    qkv_b = to_head_major(qkv_b_std)              # (L, 3H)
    o_w = w(ks[3], (L, H, H));   o_b = jnp.zeros((L, H), jnp.float32)
    f1_w = w(ks[4], (L, H, F));  f1_b = jnp.zeros((L, F), jnp.float32)
    f2_w = w(ks[5], (L, F, H));  f2_b = jnp.zeros((L, H), jnp.float32)
    sa_g = jnp.ones((L, H), jnp.float32);  sa_b = jnp.zeros((L, H), jnp.float32)
    out_g = jnp.ones((L, H), jnp.float32); out_b = jnp.zeros((L, H), jnp.float32)
    emb_g = jnp.ones((H,), jnp.float32);   emb_b = jnp.zeros((H,), jnp.float32)

    cls_w = w(ks[6], (H, NUM_LABELS))
    cls_w_pad = jnp.zeros((H, CLS_PAD), jnp.float32).at[:, :NUM_LABELS].set(cls_w)
    cls_b_pad = jnp.zeros((CLS_PAD,), jnp.float32)

    # ---- pack every small vector (+ padded classifier weight) into one slab ----
    def row(v):
        v = jnp.asarray(v, jnp.float32).reshape(1, -1)
        return jnp.pad(v, ((0, 0), (0, VEC_W - v.shape[1])))

    rows = [row(emb_g), row(emb_b)]
    for l in range(L):
        rows += [row(qkv_b[l]), row(o_b[l]), row(sa_g[l]), row(sa_b[l]),
                 row(f1_b[l]), row(f2_b[l]), row(out_g[l]), row(out_b[l])]
    rows += [row(cls_b_pad)]
    pad_rows = ROW_CLS_W - (ROW_CLS_B + 1)
    if pad_rows:
        rows += [jnp.zeros((pad_rows, VEC_W), jnp.float32)]
    rows += [cls_w_pad]
    vecs = jnp.concatenate(rows, axis=0)
    assert vecs.shape == (N_VEC_ROWS, VEC_W)

    # ---- pack the H-leading weights into one (L*H, 192) slab ----
    w_slab = jnp.concatenate([qkv_w, o_w, f1_w], axis=-1).reshape(L * H, W_SLAB_COLS)
    ffn2_w = f2_w.reshape(L * F, H)

    return {
        "word_emb": w(ks[0], (VOCAB, H)),
        "pos_emb": w(ks[1], (MAX_POS, H)),
        "vecs": vecs,
        "w_slab": w_slab,
        "ffn2_w": ffn2_w,
    }


def distilbert_ner_forward(params, input_ids, attention_mask, labels=None):
    B, S = input_ids.shape
    # Embedding gather stays in plain JAX glue (data-dependent gather).
    x = params["word_emb"][input_ids] + params["pos_emb"][jnp.arange(S)][None]
    x = x.reshape(B * S, HIDDEN).astype(jnp.float32)

    # Merged block-diagonal attention mask, rows/cols in (b, h, s) order:
    # valid iff same (batch, head) block AND the key position is not padded.
    idx = jnp.arange(B * N_HEADS * S)
    blk = idx // S                      # flat (b * N_HEADS + h) block index
    b_idx = blk // N_HEADS
    s_idx = idx % S
    same_block = blk[:, None] == blk[None, :]
    key_ok = attention_mask[b_idx, s_idx] > 0
    mask_full = jnp.where(same_block & key_ok[None, :], 0.0, -1e30).astype(jnp.float32)

    if labels is None:
        logits_pad = _fused_forward(params, x, mask_full, None, B, S)
        return logits_pad[:, :NUM_LABELS].reshape(B, S, NUM_LABELS)

    logits_pad = _fused_forward(params, x, mask_full, labels, B, S)
    logits = logits_pad[:, :NUM_LABELS].reshape(B, S, NUM_LABELS)
    loss = logits_pad[0, NUM_LABELS]     # scalar loss stashed in a spare pad lane
    return loss, logits


# ---------------------------------------------------------------------------
if __name__ == "__main__":
    key = jax.random.PRNGKey(0)
    B, S = 2, 8
    pkey, ikey, lkey = jax.random.split(key, 3)

    params = init_params(pkey)
    input_ids = jax.random.randint(ikey, (B, S), 0, VOCAB, dtype=jnp.int32)
    attention_mask = jnp.array([[1, 1, 1, 1, 1, 1, 1, 1],
                                [1, 1, 1, 1, 1, 1, 0, 0]], dtype=jnp.int32)
    labels = jax.random.randint(lkey, (B, S), 0, NUM_LABELS, dtype=jnp.int32)
    labels = jnp.where(attention_mask > 0, labels, -100)

    # labels=None path (returns logits only), like the PyTorch module.
    logits_only = distilbert_ner_forward(params, input_ids, attention_mask)
    # labels path (returns (loss, logits)).
    loss, logits = distilbert_ner_forward(params, input_ids, attention_mask, labels)

    jax.block_until_ready((logits_only, loss, logits))
    assert logits.shape == (B, S, NUM_LABELS)
    assert logits_only.shape == (B, S, NUM_LABELS)
    assert jnp.allclose(logits_only, logits)
    assert jnp.isfinite(loss)
    print("KERNEL_OK")
</pallas_src>

<mosaic_0001>
module attributes {stable_mosaic.version = 11 : i64} {
  func.func @_fused_forward_kernel(%arg0: i32, %arg1: memref<16x32xf32, #tpu.memory_space<vmem>>, %arg2: memref<32x32xf32, #tpu.memory_space<vmem>>, %arg3: memref<56x128xf32, #tpu.memory_space<vmem>>, %arg4: memref<64x192xf32, #tpu.memory_space<vmem>>, %arg5: memref<128x32xf32, #tpu.memory_space<vmem>>, %arg6: memref<16x128xf32, #tpu.memory_space<vmem>>) attributes {dimension_semantics = [#tpu.dimension_semantics<arbitrary>], iteration_bounds = array<i64: 1>, scalar_prefetch = 0 : i64, scratch_operands = 0 : i64, tpu.core_type = #tpu.core_type<tc>, window_params = [{pipeline_mode = #tpu.pipeline_mode<synchronous>, transform_indices = @transform_0, window_bounds = array<i64: 16, 32>}, {pipeline_mode = #tpu.pipeline_mode<synchronous>, transform_indices = @transform_1, window_bounds = array<i64: 32, 32>}, {pipeline_mode = #tpu.pipeline_mode<synchronous>, transform_indices = @transform_2, window_bounds = array<i64: 56, 128>}, {pipeline_mode = #tpu.pipeline_mode<synchronous>, transform_indices = @transform_3, window_bounds = array<i64: 64, 192>}, {pipeline_mode = #tpu.pipeline_mode<synchronous>, transform_indices = @transform_4, window_bounds = array<i64: 128, 32>}, {pipeline_mode = #tpu.pipeline_mode<synchronous>, transform_indices = @transform_5, window_bounds = array<i64: 16, 128>}]} {
    %c0 = arith.constant 0 : index
    %c0_0 = arith.constant 0 : index
    %0 = vector.load %arg1[%c0, %c0_0] : memref<16x32xf32, #tpu.memory_space<vmem>>, vector<16x32xf32>
    %c0_1 = arith.constant 0 : index
    %c0_2 = arith.constant 0 : index
    %1 = vector.load %arg3[%c0_1, %c0_2] : memref<56x128xf32, #tpu.memory_space<vmem>>, vector<1x32xf32>
    %c1 = arith.constant 1 : index
    %c0_3 = arith.constant 0 : index
    %2 = vector.load %arg3[%c1, %c0_3] : memref<56x128xf32, #tpu.memory_space<vmem>>, vector<1x32xf32>
    %cst = arith.constant dense<0.000000e+00> : vector<16xf32>
    %3 = vector.multi_reduction <add>, %0, %cst [1] : vector<16x32xf32> to vector<16xf32>
    %4 = vector.shape_cast %3 : vector<16xf32> to vector<16x1xf32>
    %cst_4 = arith.constant 3.200000e+01 : f32
    %5 = vector.broadcast %cst_4 : f32 to vector<16x1xf32>
    %6 = arith.divf %4, %5 : vector<16x1xf32>
    %7 = arith.mulf %0, %0 : vector<16x32xf32>
    %cst_5 = arith.constant dense<0.000000e+00> : vector<16xf32>
    %8 = vector.multi_reduction <add>, %7, %cst_5 [1] : vector<16x32xf32> to vector<16xf32>
    %9 = vector.shape_cast %8 : vector<16xf32> to vector<16x1xf32>
    %cst_6 = arith.constant 3.200000e+01 : f32
    %10 = vector.broadcast %cst_6 : f32 to vector<16x1xf32>
    %11 = arith.divf %9, %10 : vector<16x1xf32>
    %12 = arith.mulf %6, %6 : vector<16x1xf32>
    %13 = arith.subf %11, %12 : vector<16x1xf32>
    %14 = vector.broadcast %6 : vector<16x1xf32> to vector<16x32xf32>
    %15 = arith.subf %0, %14 : vector<16x32xf32>
    %cst_7 = arith.constant 9.99999996E-13 : f32
    %16 = vector.broadcast %cst_7 : f32 to vector<16x1xf32>
    %17 = arith.addf %13, %16 : vector<16x1xf32>
    %18 = math.rsqrt %17 : vector<16x1xf32>
    %19 = vector.broadcast %18 : vector<16x1xf32> to vector<16x32xf32>
    %20 = arith.mulf %15, %19 : vector<16x32xf32>
    %21 = vector.broadcast %1 : vector<1x32xf32> to vector<16x32xf32>
    %22 = arith.mulf %20, %21 : vector<16x32xf32>
    %23 = vector.broadcast %2 : vector<1x32xf32> to vector<16x32xf32>
    %24 = arith.addf %22, %23 : vector<16x32xf32>
    %c0_8 = arith.constant 0 : index
    %c0_9 = arith.constant 0 : index
    %25 = vector.load %arg2[%c0_8, %c0_9] : memref<32x32xf32, #tpu.memory_space<vmem>>, vector<32x32xf32>
    %c2 = arith.constant 2 : index
    %c0_10 = arith.constant 0 : index
    %26 = vector.load %arg3[%c2, %c0_10] : memref<56x128xf32, #tpu.memory_space<vmem>>, vector<1x96xf32>
    %c3 = arith.constant 3 : index
    %c0_11 = arith.constant 0 : index
    %27 = vector.load %arg3[%c3, %c0_11] : memref<56x128xf32, #tpu.memory_space<vmem>>, vector<1x32xf32>
    %c4 = arith.constant 4 : index
    %c0_12 = arith.constant 0 : index
    %28 = vector.load %arg3[%c4, %c0_12] : memref<56x128xf32, #tpu.memory_space<vmem>>, vector<1x32xf32>
    %c5 = arith.constant 5 : index
    %c0_13 = arith.constant 0 : index
    %29 = vector.load %arg3[%c5, %c0_13] : memref<56x128xf32, #tpu.memory_space<vmem>>, vector<1x32xf32>
    %c6 = arith.constant 6 : index
    %c0_14 = arith.constant 0 : index
    %30 = vector.load %arg3[%c6, %c0_14] : memref<56x128xf32, #tpu.memory_space<vmem>>, vector<1x64xf32>
    %c7 = arith.constant 7 : index
    %c0_15 = arith.constant 0 : index
    %31 = vector.load %arg3[%c7, %c0_15] : memref<56x128xf32, #tpu.memory_space<vmem>>, vector<1x32xf32>
    %c8 = arith.constant 8 : index
    %c0_16 = arith.constant 0 : index
    %32 = vector.load %arg3[%c8, %c0_16] : memref<56x128xf32, #tpu.memory_space<vmem>>, vector<1x32xf32>
    %c9 = arith.constant 9 : index
    %c0_17 = arith.constant 0 : index
    %33 = vector.load %arg3[%c9, %c0_17] : memref<56x128xf32, #tpu.memory_space<vmem>>, vector<1x32xf32>
    %c0_18 = arith.constant 0 : index
    %c0_19 = arith.constant 0 : index
    %34 = vector.load %arg4[%c0_18, %c0_19] : memref<64x192xf32, #tpu.memory_space<vmem>>, vector<32x96xf32>
    %c0_20 = arith.constant 0 : index
    %c96 = arith.constant 96 : index
    %35 = vector.load %arg4[%c0_20, %c96] : memref<64x192xf32, #tpu.memory_space<vmem>>, vector<32x32xf32>
    %c0_21 = arith.constant 0 : index
    %c128 = arith.constant 128 : index
    %36 = vector.load %arg4[%c0_21, %c128] : memref<64x192xf32, #tpu.memory_space<vmem>>, vector<32x64xf32>
    %c0_22 = arith.constant 0 : index
    %c0_23 = arith.constant 0 : index
    %37 = vector.load %arg5[%c0_22, %c0_23] : memref<128x32xf32, #tpu.memory_space<vmem>>, vector<64x32xf32>
    %cst_24 = arith.constant dense<0.000000e+00> : vector<16x96xf32>
    %38 = tpu.matmul %24, %34, %cst_24 {dimension_numbers = #tpu.dot_dimension_numbers<[1], [0], [0], [1], [0, 0, 1, 1], [], []>} : vector<16x32xf32>, vector<32x96xf32>, vector<16x96xf32> -> vector<16x96xf32>
    %39 = vector.broadcast %26 : vector<1x96xf32> to vector<16x96xf32>
    %40 = arith.addf %38, %39 : vector<16x96xf32>
    %41 = vector.extract_strided_slice %40 {offsets = [0, 0], sizes = [8, 48], strides = [1, 1]} : vector<16x96xf32> to vector<8x48xf32>
    %42 = vector.extract_strided_slice %40 {offsets = [0, 48], sizes = [8, 48], strides = [1, 1]} : vector<16x96xf32> to vector<8x48xf32>
    %43 = vector.extract_strided_slice %40 {offsets = [8, 0], sizes = [8, 48], strides = [1, 1]} : vector<16x96xf32> to vector<8x48xf32>
    %44 = vector.extract_strided_slice %40 {offsets = [8, 48], sizes = [8, 48], strides = [1, 1]} : vector<16x96xf32> to vector<8x48xf32>
    %45 = tpu.concatenate %41, %42, %43, %44 in 0 : vector<8x48xf32>, vector<8x48xf32>, vector<8x48xf32>, vector<8x48xf32> -> vector<32x48xf32>
    %46 = vector.extract_strided_slice %45 {offsets = [0, 0], sizes = [32, 16], strides = [1, 1]} : vector<32x48xf32> to vector<32x16xf32>
    %47 = vector.extract_strided_slice %45 {offsets = [0, 16], sizes = [32, 16], strides = [1, 1]} : vector<32x48xf32> to vector<32x16xf32>
    %48 = vector.extract_strided_slice %45 {offsets = [0, 32], sizes = [32, 16], strides = [1, 1]} : vector<32x48xf32> to vector<32x16xf32>
    %cst_25 = arith.constant dense<0.000000e+00> : vector<32x32xf32>
    %49 = tpu.matmul %46, %47, %cst_25 {dimension_numbers = #tpu.dot_dimension_numbers<[1], [1], [0], [0], [0, 0, 1, 0], [], []>} : vector<32x16xf32>, vector<32x16xf32>, vector<32x32xf32> -> vector<32x32xf32>
    %50 = arith.addf %49, %25 : vector<32x32xf32>
    %cst_26 = arith.constant dense<0xFF800000> : vector<32xf32>
    %51 = vector.multi_reduction <maximumf>, %50, %cst_26 [1] : vector<32x32xf32> to vector<32xf32>
    %52 = vector.shape_cast %51 : vector<32xf32> to vector<32x1xf32>
    %53 = vector.broadcast %52 : vector<32x1xf32> to vector<32x32xf32>
    %54 = arith.subf %50, %53 : vector<32x32xf32>
    %55 = math.exp %54 : vector<32x32xf32>
    %cst_27 = arith.constant dense<0.000000e+00> : vector<32xf32>
    %56 = vector.multi_reduction <add>, %55, %cst_27 [1] : vector<32x32xf32> to vector<32xf32>
    %57 = vector.shape_cast %56 : vector<32xf32> to vector<32x1xf32>
    %58 = tpu.reciprocal %57 {approx = true} : vector<32x1xf32> -> vector<32x1xf32>
    %59 = vector.broadcast %58 : vector<32x1xf32> to vector<32x32xf32>
    %60 = arith.mulf %55, %59 : vector<32x32xf32>
    %cst_28 = arith.constant dense<0.000000e+00> : vector<32x16xf32>
    %61 = tpu.matmul %60, %48, %cst_28 {dimension_numbers = #tpu.dot_dimension_numbers<[1], [0], [0], [1], [0, 0, 1, 1], [], []>} : vector<32x32xf32>, vector<32x16xf32>, vector<32x16xf32> -> vector<32x16xf32>
    %62 = vector.extract_strided_slice %61 {offsets = [0, 0], sizes = [8, 16], strides = [1, 1]} : vector<32x16xf32> to vector<8x16xf32>
    %63 = vector.extract_strided_slice %61 {offsets = [8, 0], sizes = [8, 16], strides = [1, 1]} : vector<32x16xf32> to vector<8x16xf32>
    %64 = tpu.concatenate %62, %63 in 1 : vector<8x16xf32>, vector<8x16xf32> -> vector<8x32xf32>
    %65 = vector.extract_strided_slice %61 {offsets = [16, 0], sizes = [8, 16], strides = [1, 1]} : vector<32x16xf32> to vector<8x16xf32>
    %66 = vector.extract_strided_slice %61 {offsets = [24, 0], sizes = [8, 16], strides = [1, 1]} : vector<32x16xf32> to vector<8x16xf32>
    %67 = tpu.concatenate %65, %66 in 1 : vector<8x16xf32>, vector<8x16xf32> -> vector<8x32xf32>
    %68 = tpu.concatenate %64, %67 in 0 : vector<8x32xf32>, vector<8x32xf32> -> vector<16x32xf32>
    %cst_29 = arith.constant dense<0.000000e+00> : vector<16x32xf32>
    %69 = tpu.matmul %68, %35, %cst_29 {dimension_numbers = #tpu.dot_dimension_numbers<[1], [0], [0], [1], [0, 0, 1, 1], [], []>} : vector<16x32xf32>, vector<32x32xf32>, vector<16x32xf32> -> vector<16x32xf32>
    %70 = vector.broadcast %27 : vector<1x32xf32> to vector<16x32xf32>
    %71 = arith.addf %69, %70 : vector<16x32xf32>
    %72 = arith.addf %71, %24 : vector<16x32xf32>
    %cst_30 = arith.constant dense<0.000000e+00> : vector<16xf32>
    %73 = vector.multi_reduction <add>, %72, %cst_30 [1] : vector<16x32xf32> to vector<16xf32>
    %74 = vector.shape_cast %73 : vector<16xf32> to vector<16x1xf32>
    %cst_31 = arith.constant 3.200000e+01 : f32
    %75 = vector.broadcast %cst_31 : f32 to vector<16x1xf32>
    %76 = arith.divf %74, %75 : vector<16x1xf32>
    %77 = arith.mulf %72, %72 : vector<16x32xf32>
    %cst_32 = arith.constant dense<0.000000e+00> : vector<16xf32>
    %78 = vector.multi_reduction <add>, %77, %cst_32 [1] : vector<16x32xf32> to vector<16xf32>
    %79 = vector.shape_cast %78 : vector<16xf32> to vector<16x1xf32>
    %cst_33 = arith.constant 3.200000e+01 : f32
    %80 = vector.broadcast %cst_33 : f32 to vector<16x1xf32>
    %81 = arith.divf %79, %80 : vector<16x1xf32>
    %82 = arith.mulf %76, %76 : vector<16x1xf32>
    %83 = arith.subf %81, %82 : vector<16x1xf32>
    %84 = vector.broadcast %76 : vector<16x1xf32> to vector<16x32xf32>
    %85 = arith.subf %72, %84 : vector<16x32xf32>
    %cst_34 = arith.constant 9.99999996E-13 : f32
    %86 = vector.broadcast %cst_34 : f32 to vector<16x1xf32>
    %87 = arith.addf %83, %86 : vector<16x1xf32>
    %88 = math.rsqrt %87 : vector<16x1xf32>
    %89 = vector.broadcast %88 : vector<16x1xf32> to vector<16x32xf32>
    %90 = arith.mulf %85, %89 : vector<16x32xf32>
    %91 = vector.broadcast %28 : vector<1x32xf32> to vector<16x32xf32>
    %92 = arith.mulf %90, %91 : vector<16x32xf32>
    %93 = vector.broadcast %29 : vector<1x32xf32> to vector<16x32xf32>
    %94 = arith.addf %92, %93 : vector<16x32xf32>
    %cst_35 = arith.constant dense<0.000000e+00> : vector<16x64xf32>
    %95 = tpu.matmul %94, %36, %cst_35 {dimension_numbers = #tpu.dot_dimension_numbers<[1], [0], [0], [1], [0, 0, 1, 1], [], []>} : vector<16x32xf32>, vector<32x64xf32>, vector<16x64xf32> -> vector<16x64xf32>
    %96 = vector.broadcast %30 : vector<1x64xf32> to vector<16x64xf32>
    %97 = arith.addf %95, %96 : vector<16x64xf32>
    %98 = arith.mulf %97, %97 : vector<16x64xf32>
    %99 = arith.mulf %97, %98 : vector<16x64xf32>
    %cst_36 = arith.constant 4.471500e-02 : f32
    %100 = vector.broadcast %cst_36 : f32 to vector<16x64xf32>
    %101 = arith.mulf %100, %99 : vector<16x64xf32>
    %102 = arith.addf %97, %101 : vector<16x64xf32>
    %cst_37 = arith.constant 0.797884583 : f32
    %103 = vector.broadcast %cst_37 : f32 to vector<16x64xf32>
    %104 = arith.mulf %103, %102 : vector<16x64xf32>
    %105 = math.tanh %104 : vector<16x64xf32>
    %cst_38 = arith.constant 1.000000e+00 : f32
    %106 = vector.broadcast %cst_38 : f32 to vector<16x64xf32>
    %107 = arith.addf %106, %105 : vector<16x64xf32>
    %cst_39 = arith.constant 5.000000e-01 : f32
    %108 = vector.broadcast %cst_39 : f32 to vector<16x64xf32>
    %109 = arith.mulf %108, %107 : vector<16x64xf32>
    %110 = arith.mulf %97, %109 : vector<16x64xf32>
    %cst_40 = arith.constant dense<0.000000e+00> : vector<16x32xf32>
    %111 = tpu.matmul %110, %37, %cst_40 {dimension_numbers = #tpu.dot_dimension_numbers<[1], [0], [0], [1], [0, 0, 1, 1], [], []>} : vector<16x64xf32>, vector<64x32xf32>, vector<16x32xf32> -> vector<16x32xf32>
    %112 = vector.broadcast %31 : vector<1x32xf32> to vector<16x32xf32>
    %113 = arith.addf %111, %112 : vector<16x32xf32>
    %114 = arith.addf %113, %94 : vector<16x32xf32>
    %cst_41 = arith.constant dense<0.000000e+00> : vector<16xf32>
    %115 = vector.multi_reduction <add>, %114, %cst_41 [1] : vector<16x32xf32> to vector<16xf32>
    %116 = vector.shape_cast %115 : vector<16xf32> to vector<16x1xf32>
    %cst_42 = arith.constant 3.200000e+01 : f32
    %117 = vector.broadcast %cst_42 : f32 to vector<16x1xf32>
    %118 = arith.divf %116, %117 : vector<16x1xf32>
    %119 = arith.mulf %114, %114 : vector<16x32xf32>
    %cst_43 = arith.constant dense<0.000000e+00> : vector<16xf32>
    %120 = vector.multi_reduction <add>, %119, %cst_43 [1] : vector<16x32xf32> to vector<16xf32>
    %121 = vector.shape_cast %120 : vector<16xf32> to vector<16x1xf32>
    %cst_44 = arith.constant 3.200000e+01 : f32
    %122 = vector.broadcast %cst_44 : f32 to vector<16x1xf32>
    %123 = arith.divf %121, %122 : vector<16x1xf32>
    %124 = arith.mulf %118, %118 : vector<16x1xf32>
    %125 = arith.subf %123, %124 : vector<16x1xf32>
    %126 = vector.broadcast %118 : vector<16x1xf32> to vector<16x32xf32>
    %127 = arith.subf %114, %126 : vector<16x32xf32>
    %cst_45 = arith.constant 9.99999996E-13 : f32
    %128 = vector.broadcast %cst_45 : f32 to vector<16x1xf32>
    %129 = arith.addf %125, %128 : vector<16x1xf32>
    %130 = math.rsqrt %129 : vector<16x1xf32>
    %131 = vector.broadcast %130 : vector<16x1xf32> to vector<16x32xf32>
    %132 = arith.mulf %127, %131 : vector<16x32xf32>
    %133 = vector.broadcast %32 : vector<1x32xf32> to vector<16x32xf32>
    %134 = arith.mulf %132, %133 : vector<16x32xf32>
    %135 = vector.broadcast %33 : vector<1x32xf32> to vector<16x32xf32>
    %136 = arith.addf %134, %135 : vector<16x32xf32>
    %c10 = arith.constant 10 : index
    %c0_46 = arith.constant 0 : index
    %137 = vector.load %arg3[%c10, %c0_46] : memref<56x128xf32, #tpu.memory_space<vmem>>, vector<1x96xf32>
    %c11 = arith.constant 11 : index
    %c0_47 = arith.constant 0 : index
    %138 = vector.load %arg3[%c11, %c0_47] : memref<56x128xf32, #tpu.memory_space<vmem>>, vector<1x32xf32>
    %c12 = arith.constant 12 : index
    %c0_48 = arith.constant 0 : index
    %139 = vector.load %arg3[%c12, %c0_48] : memref<56x128xf32, #tpu.memory_space<vmem>>, vector<1x32xf32>
    %c13 = arith.constant 13 : index
    %c0_49 = arith.constant 0 : index
    %140 = vector.load %arg3[%c13, %c0_49] : memref<56x128xf32, #tpu.memory_space<vmem>>, vector<1x32xf32>
    %c14 = arith.constant 14 : index
    %c0_50 = arith.constant 0 : index
    %141 = vector.load %arg3[%c14, %c0_50] : memref<56x128xf32, #tpu.memory_space<vmem>>, vector<1x64xf32>
    %c15 = arith.constant 15 : index
    %c0_51 = arith.constant 0 : index
    %142 = vector.load %arg3[%c15, %c0_51] : memref<56x128xf32, #tpu.memory_space<vmem>>, vector<1x32xf32>
    %c16 = arith.constant 16 : index
    %c0_52 = arith.constant 0 : index
    %143 = vector.load %arg3[%c16, %c0_52] : memref<56x128xf32, #tpu.memory_space<vmem>>, vector<1x32xf32>
    %c17 = arith.constant 17 : index
    %c0_53 = arith.constant 0 : index
    %144 = vector.load %arg3[%c17, %c0_53] : memref<56x128xf32, #tpu.memory_space<vmem>>, vector<1x32xf32>
    %c32 = arith.constant 32 : index
    %c0_54 = arith.constant 0 : index
    %145 = vector.load %arg4[%c32, %c0_54] : memref<64x192xf32, #tpu.memory_space<vmem>>, vector<32x96xf32>
    %c32_55 = arith.constant 32 : index
    %c96_56 = arith.constant 96 : index
    %146 = vector.load %arg4[%c32_55, %c96_56] : memref<64x192xf32, #tpu.memory_space<vmem>>, vector<32x32xf32>
    %c32_57 = arith.constant 32 : index
    %c128_58 = arith.constant 128 : index
    %147 = vector.load %arg4[%c32_57, %c128_58] : memref<64x192xf32, #tpu.memory_space<vmem>>, vector<32x64xf32>
    %c64 = arith.constant 64 : index
    %c0_59 = arith.constant 0 : index
    %148 = vector.load %arg5[%c64, %c0_59] : memref<128x32xf32, #tpu.memory_space<vmem>>, vector<64x32xf32>
    %cst_60 = arith.constant dense<0.000000e+00> : vector<16x96xf32>
    %149 = tpu.matmul %136, %145, %cst_60 {dimension_numbers = #tpu.dot_dimension_numbers<[1], [0], [0], [1], [0, 0, 1, 1], [], []>} : vector<16x32xf32>, vector<32x96xf32>, vector<16x96xf32> -> vector<16x96xf32>
    %150 = vector.broadcast %137 : vector<1x96xf32> to vector<16x96xf32>
    %151 = arith.addf %149, %150 : vector<16x96xf32>
    %152 = vector.extract_strided_slice %151 {offsets = [0, 0], sizes = [8, 48], strides = [1, 1]} : vector<16x96xf32> to vector<8x48xf32>
    %153 = vector.extract_strided_slice %151 {offsets = [0, 48], sizes = [8, 48], strides = [1, 1]} : vector<16x96xf32> to vector<8x48xf32>
    %154 = vector.extract_strided_slice %151 {offsets = [8, 0], sizes = [8, 48], strides = [1, 1]} : vector<16x96xf32> to vector<8x48xf32>
    %155 = vector.extract_strided_slice %151 {offsets = [8, 48], sizes = [8, 48], strides = [1, 1]} : vector<16x96xf32> to vector<8x48xf32>
    %156 = tpu.concatenate %152, %153, %154, %155 in 0 : vector<8x48xf32>, vector<8x48xf32>, vector<8x48xf32>, vector<8x48xf32> -> vector<32x48xf32>
    %157 = vector.extract_strided_slice %156 {offsets = [0, 0], sizes = [32, 16], strides = [1, 1]} : vector<32x48xf32> to vector<32x16xf32>
    %158 = vector.extract_strided_slice %156 {offsets = [0, 16], sizes = [32, 16], strides = [1, 1]} : vector<32x48xf32> to vector<32x16xf32>
    %159 = vector.extract_strided_slice %156 {offsets = [0, 32], sizes = [32, 16], strides = [1, 1]} : vector<32x48xf32> to vector<32x16xf32>
    %cst_61 = arith.constant dense<0.000000e+00> : vector<32x32xf32>
    %160 = tpu.matmul %157, %158, %cst_61 {dimension_numbers = #tpu.dot_dimension_numbers<[1], [1], [0], [0], [0, 0, 1, 0], [], []>} : vector<32x16xf32>, vector<32x16xf32>, vector<32x32xf32> -> vector<32x32xf32>
    %161 = arith.addf %160, %25 : vector<32x32xf32>
    %cst_62 = arith.constant dense<0xFF800000> : vector<32xf32>
    %162 = vector.multi_reduction <maximumf>, %161, %cst_62 [1] : vector<32x32xf32> to vector<32xf32>
    %163 = vector.shape_cast %162 : vector<32xf32> to vector<32x1xf32>
    %164 = vector.broadcast %163 : vector<32x1xf32> to vector<32x32xf32>
    %165 = arith.subf %161, %164 : vector<32x32xf32>
    %166 = math.exp %165 : vector<32x32xf32>
    %cst_63 = arith.constant dense<0.000000e+00> : vector<32xf32>
    %167 = vector.multi_reduction <add>, %166, %cst_63 [1] : vector<32x32xf32> to vector<32xf32>
    %168 = vector.shape_cast %167 : vector<32xf32> to vector<32x1xf32>
    %169 = tpu.reciprocal %168 {approx = true} : vector<32x1xf32> -> vector<32x1xf32>
    %170 = vector.broadcast %169 : vector<32x1xf32> to vector<32x32xf32>
    %171 = arith.mulf %166, %170 : vector<32x32xf32>
    %cst_64 = arith.constant dense<0.000000e+00> : vector<32x16xf32>
    %172 = tpu.matmul %171, %159, %cst_64 {dimension_numbers = #tpu.dot_dimension_numbers<[1], [0], [0], [1], [0, 0, 1, 1], [], []>} : vector<32x32xf32>, vector<32x16xf32>, vector<32x16xf32> -> vector<32x16xf32>
    %173 = vector.extract_strided_slice %172 {offsets = [0, 0], sizes = [8, 16], strides = [1, 1]} : vector<32x16xf32> to vector<8x16xf32>
    %174 = vector.extract_strided_slice %172 {offsets = [8, 0], sizes = [8, 16], strides = [1, 1]} : vector<32x16xf32> to vector<8x16xf32>
    %175 = tpu.concatenate %173, %174 in 1 : vector<8x16xf32>, vector<8x16xf32> -> vector<8x32xf32>
    %176 = vector.extract_strided_slice %172 {offsets = [16, 0], sizes = [8, 16], strides = [1, 1]} : vector<32x16xf32> to vector<8x16xf32>
    %177 = vector.extract_strided_slice %172 {offsets = [24, 0], sizes = [8, 16], strides = [1, 1]} : vector<32x16xf32> to vector<8x16xf32>
    %178 = tpu.concatenate %176, %177 in 1 : vector<8x16xf32>, vector<8x16xf32> -> vector<8x32xf32>
    %179 = tpu.concatenate %175, %178 in 0 : vector<8x32xf32>, vector<8x32xf32> -> vector<16x32xf32>
    %cst_65 = arith.constant dense<0.000000e+00> : vector<16x32xf32>
    %180 = tpu.matmul %179, %146, %cst_65 {dimension_numbers = #tpu.dot_dimension_numbers<[1], [0], [0], [1], [0, 0, 1, 1], [], []>} : vector<16x32xf32>, vector<32x32xf32>, vector<16x32xf32> -> vector<16x32xf32>
    %181 = vector.broadcast %138 : vector<1x32xf32> to vector<16x32xf32>
    %182 = arith.addf %180, %181 : vector<16x32xf32>
    %183 = arith.addf %182, %136 : vector<16x32xf32>
    %cst_66 = arith.constant dense<0.000000e+00> : vector<16xf32>
    %184 = vector.multi_reduction <add>, %183, %cst_66 [1] : vector<16x32xf32> to vector<16xf32>
    %185 = vector.shape_cast %184 : vector<16xf32> to vector<16x1xf32>
    %cst_67 = arith.constant 3.200000e+01 : f32
    %186 = vector.broadcast %cst_67 : f32 to vector<16x1xf32>
    %187 = arith.divf %185, %186 : vector<16x1xf32>
    %188 = arith.mulf %183, %183 : vector<16x32xf32>
    %cst_68 = arith.constant dense<0.000000e+00> : vector<16xf32>
    %189 = vector.multi_reduction <add>, %188, %cst_68 [1] : vector<16x32xf32> to vector<16xf32>
    %190 = vector.shape_cast %189 : vector<16xf32> to vector<16x1xf32>
    %cst_69 = arith.constant 3.200000e+01 : f32
    %191 = vector.broadcast %cst_69 : f32 to vector<16x1xf32>
    %192 = arith.divf %190, %191 : vector<16x1xf32>
    %193 = arith.mulf %187, %187 : vector<16x1xf32>
    %194 = arith.subf %192, %193 : vector<16x1xf32>
    %195 = vector.broadcast %187 : vector<16x1xf32> to vector<16x32xf32>
    %196 = arith.subf %183, %195 : vector<16x32xf32>
    %cst_70 = arith.constant 9.99999996E-13 : f32
    %197 = vector.broadcast %cst_70 : f32 to vector<16x1xf32>
    %198 = arith.addf %194, %197 : vector<16x1xf32>
    %199 = math.rsqrt %198 : vector<16x1xf32>
    %200 = vector.broadcast %199 : vector<16x1xf32> to vector<16x32xf32>
    %201 = arith.mulf %196, %200 : vector<16x32xf32>
    %202 = vector.broadcast %139 : vector<1x32xf32> to vector<16x32xf32>
    %203 = arith.mulf %201, %202 : vector<16x32xf32>
    %204 = vector.broadcast %140 : vector<1x32xf32> to vector<16x32xf32>
    %205 = arith.addf %203, %204 : vector<16x32xf32>
    %cst_71 = arith.constant dense<0.000000e+00> : vector<16x64xf32>
    %206 = tpu.matmul %205, %147, %cst_71 {dimension_numbers = #tpu.dot_dimension_numbers<[1], [0], [0], [1], [0, 0, 1, 1], [], []>} : vector<16x32xf32>, vector<32x64xf32>, vector<16x64xf32> -> vector<16x64xf32>
    %207 = vector.broadcast %141 : vector<1x64xf32> to vector<16x64xf32>
    %208 = arith.addf %206, %207 : vector<16x64xf32>
    %209 = arith.mulf %208, %208 : vector<16x64xf32>
    %210 = arith.mulf %208, %209 : vector<16x64xf32>
    %cst_72 = arith.constant 4.471500e-02 : f32
    %211 = vector.broadcast %cst_72 : f32 to vector<16x64xf32>
    %212 = arith.mulf %211, %210 : vector<16x64xf32>
    %213 = arith.addf %208, %212 : vector<16x64xf32>
    %cst_73 = arith.constant 0.797884583 : f32
    %214 = vector.broadcast %cst_73 : f32 to vector<16x64xf32>
    %215 = arith.mulf %214, %213 : vector<16x64xf32>
    %216 = math.tanh %215 : vector<16x64xf32>
    %cst_74 = arith.constant 1.000000e+00 : f32
    %217 = vector.broadcast %cst_74 : f32 to vector<16x64xf32>
    %218 = arith.addf %217, %216 : vector<16x64xf32>
    %cst_75 = arith.constant 5.000000e-01 : f32
    %219 = vector.broadcast %cst_75 : f32 to vector<16x64xf32>
    %220 = arith.mulf %219, %218 : vector<16x64xf32>
    %221 = arith.mulf %208, %220 : vector<16x64xf32>
    %cst_76 = arith.constant dense<0.000000e+00> : vector<16x32xf32>
    %222 = tpu.matmul %221, %148, %cst_76 {dimension_numbers = #tpu.dot_dimension_numbers<[1], [0], [0], [1], [0, 0, 1, 1], [], []>} : vector<16x64xf32>, vector<64x32xf32>, vector<16x32xf32> -> vector<16x32xf32>
    %223 = vector.broadcast %142 : vector<1x32xf32> to vector<16x32xf32>
    %224 = arith.addf %222, %223 : vector<16x32xf32>
    %225 = arith.addf %224, %205 : vector<16x32xf32>
    %cst_77 = arith.constant dense<0.000000e+00> : vector<16xf32>
    %226 = vector.multi_reduction <add>, %225, %cst_77 [1] : vector<16x32xf32> to vector<16xf32>
    %227 = vector.shape_cast %226 : vector<16xf32> to vector<16x1xf32>
    %cst_78 = arith.constant 3.200000e+01 : f32
    %228 = vector.broadcast %cst_78 : f32 to vector<16x1xf32>
    %229 = arith.divf %227, %228 : vector<16x1xf32>
    %230 = arith.mulf %225, %225 : vector<16x32xf32>
    %cst_79 = arith.constant dense<0.000000e+00> : vector<16xf32>
    %231 = vector.multi_reduction <add>, %230, %cst_79 [1] : vector<16x32xf32> to vector<16xf32>
    %232 = vector.shape_cast %231 : vector<16xf32> to vector<16x1xf32>
    %cst_80 = arith.constant 3.200000e+01 : f32
    %233 = vector.broadcast %cst_80 : f32 to vector<16x1xf32>
    %234 = arith.divf %232, %233 : vector<16x1xf32>
    %235 = arith.mulf %229, %229 : vector<16x1xf32>
    %236 = arith.subf %234, %235 : vector<16x1xf32>
    %237 = vector.broadcast %229 : vector<16x1xf32> to vector<16x32xf32>
    %238 = arith.subf %225, %237 : vector<16x32xf32>
    %cst_81 = arith.constant 9.99999996E-13 : f32
    %239 = vector.broadcast %cst_81 : f32 to vector<16x1xf32>
    %240 = arith.addf %236, %239 : vector<16x1xf32>
    %241 = math.rsqrt %240 : vector<16x1xf32>
    %242 = vector.broadcast %241 : vector<16x1xf32> to vector<16x32xf32>
    %243 = arith.mulf %238, %242 : vector<16x32xf32>
    %244 = vector.broadcast %143 : vector<1x32xf32> to vector<16x32xf32>
    %245 = arith.mulf %243, %244 : vector<16x32xf32>
    %246 = vector.broadcast %144 : vector<1x32xf32> to vector<16x32xf32>
    %247 = arith.addf %245, %246 : vector<16x32xf32>
    %c24 = arith.constant 24 : index
    %c0_82 = arith.constant 0 : index
    %248 = vector.load %arg3[%c24, %c0_82] : memref<56x128xf32, #tpu.memory_space<vmem>>, vector<32x128xf32>
    %c18 = arith.constant 18 : index
    %c0_83 = arith.constant 0 : index
    %249 = vector.load %arg3[%c18, %c0_83] : memref<56x128xf32, #tpu.memory_space<vmem>>, vector<1x128xf32>
    %cst_84 = arith.constant dense<0.000000e+00> : vector<16x128xf32>
    %250 = tpu.matmul %247, %248, %cst_84 {dimension_numbers = #tpu.dot_dimension_numbers<[1], [0], [0], [1], [0, 0, 1, 1], [], []>} : vector<16x32xf32>, vector<32x128xf32>, vector<16x128xf32> -> vector<16x128xf32>
    %251 = vector.broadcast %249 : vector<1x128xf32> to vector<16x128xf32>
    %252 = arith.addf %250, %251 : vector<16x128xf32>
    %c0_85 = arith.constant 0 : index
    %c0_86 = arith.constant 0 : index
    %253 = vector.load %arg6[%c0_85, %c0_86] : memref<16x128xf32, #tpu.memory_space<vmem>>, vector<16x128xf32>
    tpu.vector_store %arg6[%c0_85, %c0_86], %252 {strides = array<i32>} : memref<16x128xf32, #tpu.memory_space<vmem>>, vector<16x128xf32>,
    return
  }
  func.func @transform_0(%arg0: i32) -> (i32, i32) {
    %c0_i32 = arith.constant 0 : i32
    %c0_i32_0 = arith.constant 0 : i32
    %c0_i32_1 = arith.constant 0 : i32
    return %c0_i32, %c0_i32_0 : i32, i32
  }
  func.func @transform_1(%arg0: i32) -> (i32, i32) {
    %c0_i32 = arith.constant 0 : i32
    %c0_i32_0 = arith.constant 0 : i32
    %c0_i32_1 = arith.constant 0 : i32
    return %c0_i32, %c0_i32_0 : i32, i32
  }
  func.func @transform_2(%arg0: i32) -> (i32, i32) {
    %c0_i32 = arith.constant 0 : i32
    %c0_i32_0 = arith.constant 0 : i32
    %c0_i32_1 = arith.constant 0 : i32
    return %c0_i32, %c0_i32_0 : i32, i32
  }
  func.func @transform_3(%arg0: i32) -> (i32, i32) {
    %c0_i32 = arith.constant 0 : i32
    %c0_i32_0 = arith.constant 0 : i32
    %c0_i32_1 = arith.constant 0 : i32
    return %c0_i32, %c0_i32_0 : i32, i32
  }
  func.func @transform_4(%arg0: i32) -> (i32, i32) {
    %c0_i32 = arith.constant 0 : i32
    %c0_i32_0 = arith.constant 0 : i32
    %c0_i32_1 = arith.constant 0 : i32
    return %c0_i32, %c0_i32_0 : i32, i32
  }
  func.func @transform_5(%arg0: i32) -> (i32, i32) {
    %c0_i32 = arith.constant 0 : i32
    %c0_i32_0 = arith.constant 0 : i32
    %c0_i32_1 = arith.constant 0 : i32
    return %c0_i32, %c0_i32_0 : i32, i32
  }
}

</mosaic_0001>

<llo_original>
// kernel: tpu_custom_call.1
$region0: #{tpu_custom_call.1}
  #allocation0 [shape = 'u32[]', space=smem, size = 0x4, offset = 0x4, fixed_abs, tag = 'smem constant byte address 0x4 - core index']
  #allocation1 [shape = 'u32[144,128]{1,0:T(1,128)}', space=vmem, size = 0x12000, scoped, tag = 'internal scratch']
  %s0 = inlined_call_operand.hbm [shape: f32[16,32], index: 0, kind: input, shape index: {}]
  %s1 = inlined_call_operand.vmem [shape: f32[32,32], index: 1, kind: input, shape index: {}]
  %s2 = inlined_call_operand.hbm [shape: f32[56,128], index: 2, kind: input, shape index: {}]
  %s3 = inlined_call_operand.vmem [shape: f32[64,192], index: 3, kind: input, shape index: {}]
  %s4 = inlined_call_operand.vmem [shape: f32[128,32], index: 4, kind: input, shape index: {}]
  %s5 = inlined_call_operand.hbm [shape: f32[16,128], index: 5, kind: output, shape index: {}]
  %s6 = sld [smem:[#allocation0]]
  $region38: #{tpu_custom_call.1} parent=0
    _
  %s8 = ssub.s32 1, %s6
  %s9 = scalar_select 0, %s8, %s6
  $region1: #{tpu_custom_call.1} parent=0
    #allocation2 [shape = 'u8[8192]{0}', space=vmem, size = 0x2000, scoped, tag = 'input window, operand 0, single buffered']
    #allocation3 [shape = 's32[1]{0}', space=sflag, size = 0x4, scoped, tag = 'scoped memory for tpu_custom_call.1']
    #allocation4 [shape = 's32[1]{0}', space=sflag, size = 0x4, scoped, tag = 'scoped memory for tpu_custom_call.1']
    #allocation5 [shape = 'u8[28672]{0}', space=vmem, size = 0x7000, scoped, tag = 'input window, operand 2, single buffered']
    #allocation6 [shape = 's32[1]{0}', space=sflag, size = 0x4, scoped, tag = 'scoped memory for tpu_custom_call.1']
    #allocation7 [shape = 'u8[8192]{0}', space=vmem, size = 0x2000, scoped, tag = 'output window, operand 0, single buffered']
    %10 = vsyncpa [#allocation3], 0
    %11 = vsyncpa [#allocation6], 0
    %12 = vsyncpa [#allocation4], 0
    // Predicated region
    $region2: #{tpu_custom_call.1} parent=1 // pred_check
      _
    $region3: #{tpu_custom_call.1} parent=1 // pred_check_branch
      %14 = sbr.rel (0) target = $region5
    $region4: #{tpu_custom_call.1} parent=1 // pred_region
      %s16 = ssub.s32 256, 256
      %17 = vsyncadd [#allocation3], %s16
      %s18 = sshll.u32 [#allocation2], 4
      %s19 = int_to_ptr.vmem [resolvable:$true] %s18
      %24 = dma.hbm_to_vmem [thread:$0]  %s0, 256, %s19, [#allocation3], 128, 128, 8
    $region5: #{tpu_custom_call.1} parent=1 // pred_fallthru
      _
    // Predicated region
    $region6: #{tpu_custom_call.1} parent=1 // pred_check
      _
    $region7: #{tpu_custom_call.1} parent=1 // pred_check_branch
      %26 = sbr.rel (0) target = $region9
    $region8: #{tpu_custom_call.1} parent=1 // pred_region
      _
    $region9: #{tpu_custom_call.1} parent=1 // pred_fallthru
      _
    // Predicated region
    $region10: #{tpu_custom_call.1} parent=1 // pred_check
      _
    $region11: #{tpu_custom_call.1} parent=1 // pred_check_branch
      %28 = sbr.rel (0) target = $region13
    $region12: #{tpu_custom_call.1} parent=1 // pred_region
      %s30 = ssub.s32 896, 896
      %31 = vsyncadd [#allocation6], %s30
      %s32 = sshll.u32 [#allocation5], 4
      %s33 = int_to_ptr.vmem [resolvable:$true] %s32
      %38 = dma.hbm_to_vmem [thread:$0]  %s2, 896, %s33, [#allocation6], 128, 128, 8
    $region13: #{tpu_custom_call.1} parent=1 // pred_fallthru
      _
    // Predicated region
    $region14: #{tpu_custom_call.1} parent=1 // pred_check
      _
    $region15: #{tpu_custom_call.1} parent=1 // pred_check_branch
      %40 = sbr.rel (0) target = $region17
    $region16: #{tpu_custom_call.1} parent=1 // pred_region
      _
    $region17: #{tpu_custom_call.1} parent=1 // pred_fallthru
      _
    // Predicated region
    $region18: #{tpu_custom_call.1} parent=1 // pred_check
      _
    $region19: #{tpu_custom_call.1} parent=1 // pred_check_branch
      %42 = sbr.rel (0) target = $region21
    $region20: #{tpu_custom_call.1} parent=1 // pred_region
      _
    $region21: #{tpu_custom_call.1} parent=1 // pred_fallthru
      _
    // Predicated region
    $region22: #{tpu_custom_call.1} parent=1 // pred_check
      _
    $region23: #{tpu_custom_call.1} parent=1 // pred_check_branch
      %44 = sbr.rel (0) target = $region25
    $region24: #{tpu_custom_call.1} parent=1 // pred_region
      %45 = dma.done [#allocation3], 256
    $region25: #{tpu_custom_call.1} parent=1 // pred_fallthru
      _
    // Predicated region
    $region26: #{tpu_custom_call.1} parent=1 // pred_check
      _
    $region27: #{tpu_custom_call.1} parent=1 // pred_check_branch
      %47 = sbr.rel (0) target = $region29
    $region28: #{tpu_custom_call.1} parent=1 // pred_region
      %48 = dma.done [#allocation6], 896
    $region29: #{tpu_custom_call.1} parent=1 // pred_fallthru
      _
    %v49 = vld [vmem:[#allocation2] sm:$0xff]
    %v50 = vld [vmem:[#allocation2 + $0x8] sm:$0xff]
    %v51 = vld [vmem:[#allocation5] sm:$0x1]
    %v52 = vld [vmem:[#allocation5 + $0x1] sm:$0x1]
    %vm53 = vcmask 261120
    %v54 = vsel %vm53, %v49, 0.0
    %55 = vadd.xlane.f32.xlu0 %v54
    %v56 = vpop.xlane.xlu0 %55
    %v57 = vsel %vm53, %v50, 0.0
    %58 = vadd.xlane.f32.xlu0 %v57
    %v59 = vpop.xlane.xlu0 %58
    %v60 = vrcp.pop 32.0
    %v61 = vmul.f32 %v56, %v60
    %v62 = vmul.f32 %v59, %v60
    %v63 = vmul.f32 %v49, %v49
    %v64 = vmul.f32 %v50, %v50
    %v65 = vsel %vm53, %v63, 0.0
    %66 = vadd.xlane.f32.xlu0 %v65
    %v67 = vpop.xlane.xlu0 %66
    %v68 = vsel %vm53, %v64, 0.0
    %69 = vadd.xlane.f32.xlu0 %v68
    %v70 = vpop.xlane.xlu0 %69
    %v71 = vmul.f32 %v67, %v60
    %v72 = vmul.f32 %v70, %v60
    %v73 = vmul.f32 %v61, %v61
    %v74 = vmul.f32 %v62, %v62
    %v75 = vsub.f32 %v71, %v73
    %v76 = vsub.f32 %v72, %v74
    %v77 = vsub.f32 %v49, %v61
    %v78 = vsub.f32 %v50, %v62
    %v79 = vadd.f32 %v75, 1e-12
    %v80 = vadd.f32 %v76, 1e-12
    %v81 = vrsqrt.pop %v79
    %v82 = vrsqrt.pop %v80
    %v83 = vmul.f32 %v77, %v81
    %v84 = vmul.f32 %v78, %v82
    %v85 = vlaneseq
    %v86 = vshrl.u32 %v85, 7
    %v87 = vsub.s32 0, %v86
    %v88 = vrot.slane %v51, %v87
    %v89 = vmul.f32 %v83, %v88
    %v90 = vmul.f32 %v84, %v88
    %v91 = vlaneseq
    %v92 = vshrl.u32 %v91, 7
    %v93 = vsub.s32 0, %v92
    %v94 = vrot.slane %v52, %v93
    %v95 = vadd.f32 %v89, %v94
    %v96 = vadd.f32 %v90, %v94
    %v97 = vld [vmem:[%s1] sm:$0xff]
    %v98 = vld [vmem:[%s1 + $0x8] sm:$0xff]
    %v99 = vld [vmem:[%s1 + $0x10] sm:$0xff]
    %v100 = vld [vmem:[%s1 + $0x18] sm:$0xff]
    %v101 = vld [vmem:[#allocation5 + $0x2] sm:$0x1]
    %v102 = vld [vmem:[#allocation5 + $0x3] sm:$0x1]
    %v103 = vld [vmem:[#allocation5 + $0x4] sm:$0x1]
    %v104 = vld [vmem:[#allocation5 + $0x5] sm:$0x1]
    %v105 = vld [vmem:[#allocation5 + $0x6] sm:$0x1]
    %v106 = vld [vmem:[#allocation5 + $0x7] sm:$0x1]
    %v107 = vld [vmem:[#allocation5 + $0x8] sm:$0x1]
    %v108 = vld [vmem:[#allocation5 + $0x9] sm:$0x1]
    %v109 = vld [vmem:[%s3] sm:$0xff]
    %v110 = vld [vmem:[%s3 + $0x10] sm:$0xff]
    %v111 = vld [vmem:[%s3 + $0x20] sm:$0xff]
    %v112 = vld [vmem:[%s3 + $0x30] sm:$0xff]
    %v113 = vld [vmem:[%s3 + $0x8] sm:$0xff]
    %v114 = vld [vmem:[%s3 + $0x18] sm:$0xff]
    %v115 = vld [vmem:[%s3 + $0x28] sm:$0xff]
    %v116 = vld [vmem:[%s3 + $0x38] sm:$0xff]
    %v117 = vld [vmem:[%s4] sm:$0xff]
    %v118 = vld [vmem:[%s4 + $0x8] sm:$0xff]
    %v119 = vld [vmem:[%s4 + $0x10] sm:$0xff]
    %v120 = vld [vmem:[%s4 + $0x18] sm:$0xff]
    %v121 = vld [vmem:[%s4 + $0x20] sm:$0xff]
    %v122 = vld [vmem:[%s4 + $0x28] sm:$0xff]
    %v123 = vld [vmem:[%s4 + $0x30] sm:$0xff]
    %v124 = vld [vmem:[%s4 + $0x38] sm:$0xff]
    %v125 = vlaneseq
    %v126 = vshrl.u32 %v125, 7
    %v127 = vsub.s32 0, %v126
    %v128 = vrot.slane %v101, %v127
    %v130 = vsel %vm53, %v95, 0
    %v133 = vsel %vm53, %v96, 0
    %135 = vmatprep.subr.mxu0 0.0
    %136 = vmatpush1.msra.mxu0 %v109
    %137 = vmatprep.subr.mxu0 0.0
    %138 = vmatpush1.msra.mxu0 %v110
    %139 = vmatprep.subr.mxu0 0.0
    %140 = vmatpush1.msra.mxu0 %v111
    %141 = vmatprep.subr.mxu0 0.0
    %142 = vmatpush1.msra.mxu0 %v112
    %143 = vmatprep.subr.mxu0 0.0
    %144 = vmatpush1.msra.mxu0 0.0
    %145 = vmatprep.subr.mxu0 0.0
    %146 = vmatpush1.msra.mxu0 0.0
    %147 = vmatprep.subr.mxu0 0.0
    %148 = vmatpush1.msra.mxu0 0.0
    %149 = vmatprep.subr.mxu0 0.0
    %150 = vmatpush1.msra.mxu0 0.0
    %151 = vmatprep.subr.mxu0 0.0
    %152 = vmatpush1.msra.mxu0 0.0
    %153 = vmatprep.subr.mxu0 0.0
    %154 = vmatpush1.msra.mxu0 0.0
    %155 = vmatprep.subr.mxu0 0.0
    %156 = vmatpush1.msra.mxu0 0.0
    %157 = vmatprep.subr.mxu0 0.0
    %158 = vmatpush1.msra.mxu0 0.0
    %159 = vmatprep.subr.mxu0 0.0
    %160 = vmatpush1.msra.mxu0 0.0
    %161 = vmatprep.subr.mxu0 0.0
    %162 = vmatpush1.msra.mxu0 0.0
    %163 = vmatprep.subr.mxu0 0.0
    %164 = vmatpush1.msra.mxu0 0.0
    %165 = vmatprep.subr.mxu0 0.0
    %166 = vmatpush1.msra.mxu0 0.0
    %167 = vmatprep.subr.mxu0 0.0
    %168 = vmatpush1.msra.mxu0 0.0
    %169 = vmatprep.subr.mxu0 0.0
    %170 = vmatpush1.msra.mxu0 0.0
    %171 = vmatprep.subr.mxu0 0.0
    %172 = vmatpush1.msra.mxu0 0.0
    %173 = vmatprep.subr.mxu0 0.0
    %174 = vmatpush1.msra.mxu0 0.0
    %175 = vmatprep.subr.mxu0 0.0
    %176 = vmatpush1.msra.mxu0 0.0
    %177 = vmatprep.subr.mxu0 0.0
    %178 = vmatpush1.msra.mxu0 0.0
    %179 = vmatprep.subr.mxu0 0.0
    %180 = vmatpush1.msra.mxu0 0.0
    %181 = vmatprep.subr.mxu0 0.0
    %182 = vmatpush1.msra.mxu0 0.0
    %183 = vmatprep.subr.mxu0 0.0
    %184 = vmatpush1.msra.mxu0 0.0
    %185 = vmatprep.subr.mxu0 0.0
    %186 = vmatpush1.msra.mxu0 0.0
    %187 = vmatprep.subr.mxu0 0.0
    %188 = vmatpush1.msra.mxu0 0.0
    %189 = vmatprep.subr.mxu0 0.0
    %190 = vmatpush1.msra.mxu0 0.0
    %191 = vmatprep.subr.mxu0 0.0
    %192 = vmatpush1.msra.mxu0 0.0
    %193 = vmatprep.subr.mxu0 0.0
    %194 = vmatpush1.msra.mxu0 0.0
    %195 = vmatprep.subr.mxu0 0.0
    %196 = vmatpush1.msra.mxu0 0.0
    %197 = vmatprep.subr.mxu0 0.0
    %198 = vmatpush1.msra.mxu0 0.0
    %199 = vmatprep.mubr.f32.mxu0 0.0
    %200 = vmatmul.mubr.f32.gmra.mrb[0].mxu0 %v130
    %v201 = vpop.f32.mrb[0].mxu0
    %v202 = vadd.f32 %v128, %v201
    %v203 = vpop.f32.mrb[0].mxu0
    %204 = vmatprep.mubr.f32.mxu0 0.0
    %205 = vmatmul.mubr.f32.gmra.mrb[0].mxu0 %v133
    %v206 = vpop.f32.mrb[0].mxu0
    %v207 = vadd.f32 %v128, %v206
    %v208 = vpop.f32.mrb[0].mxu0
    %209 = vdwg.mxu0
    %211 = vrot.lane.b32.xlu0 %v202, 80
    %v212 = vpop.permute.xlu0 %211
    %214 = vrot.lane.b32.xlu0 %v207, 80
    %v215 = vpop.permute.xlu0 %214
    %216 = vrot.lane.b32.xlu0 %v202, 112
    %v217 = vpop.permute.xlu0 %216
    %218 = vrot.lane.b32.xlu0 %v212, 112
    %v219 = vpop.permute.xlu0 %218
    %220 = vrot.lane.b32.xlu0 %v207, 112
    %v221 = vpop.permute.xlu0 %220
    %222 = vrot.lane.b32.xlu0 %v215, 112
    %v223 = vpop.permute.xlu0 %222
    %vm224 = vcmask 130048
    %v225 = vsel %vm224, %v202, 0
    %v227 = vsel %vm224, %v212, 0
    %v229 = vsel %vm224, %v207, 0
    %v231 = vsel %vm224, %v215, 0
    %v233 = vsel %vm224, %v217, 0
    %v235 = vsel %vm224, %v219, 0
    %v237 = vsel %vm224, %v221, 0
    %v239 = vsel %vm224, %v223, 0
    %241 = vmatprep.subr.mxu0 0.0
    %242 = vmatpush1.xpose.msra.mxu0 %v233
    %243 = vmatprep.subr.mxu0 0.0
    %244 = vmatpush1.xpose.msra.mxu0 %v235
    %245 = vmatprep.subr.mxu0 0.0
    %246 = vmatpush1.xpose.msra.mxu0 %v237
    %247 = vmatprep.subr.mxu0 0.0
    %248 = vmatpush1.xpose.msra.mxu0 %v239
    %249 = vmatprep.subr.mxu0 0.0
    %250 = vmatpush1.xpose.msra.mxu0 0.0
    %251 = vmatprep.subr.mxu0 0.0
    %252 = vmatpush1.xpose.msra.mxu0 0.0
    %253 = vmatprep.subr.mxu0 0.0
    %254 = vmatpush1.xpose.msra.mxu0 0.0
    %255 = vmatprep.subr.mxu0 0.0
    %256 = vmatpush1.xpose.msra.mxu0 0.0
    %257 = vmatprep.subr.mxu0 0.0
    %258 = vmatpush1.xpose.msra.mxu0 0.0
    %259 = vmatprep.subr.mxu0 0.0
    %260 = vmatpush1.xpose.msra.mxu0 0.0
    %261 = vmatprep.subr.mxu0 0.0
    %262 = vmatpush1.xpose.msra.mxu0 0.0
    %263 = vmatprep.subr.mxu0 0.0
    %264 = vmatpush1.xpose.msra.mxu0 0.0
    %265 = vmatprep.subr.mxu0 0.0
    %266 = vmatpush1.xpose.msra.mxu0 0.0
    %267 = vmatprep.subr.mxu0 0.0
    %268 = vmatpush1.xpose.msra.mxu0 0.0
    %269 = vmatprep.subr.mxu0 0.0
    %270 = vmatpush1.xpose.msra.mxu0 0.0
    %271 = vmatprep.subr.mxu0 0.0
    %272 = vmatpush1.xpose.msra.mxu0 0.0
    %273 = vmatprep.subr.mxu0 0.0
    %274 = vmatpush1.xpose.msra.mxu0 0.0
    %275 = vmatprep.subr.mxu0 0.0
    %276 = vmatpush1.xpose.msra.mxu0 0.0
    %277 = vmatprep.subr.mxu0 0.0
    %278 = vmatpush1.xpose.msra.mxu0 0.0
    %279 = vmatprep.subr.mxu0 0.0
    %280 = vmatpush1.xpose.msra.mxu0 0.0
    %281 = vmatprep.subr.mxu0 0.0
    %282 = vmatpush1.xpose.msra.mxu0 0.0
    %283 = vmatprep.subr.mxu0 0.0
    %284 = vmatpush1.xpose.msra.mxu0 0.0
    %285 = vmatprep.subr.mxu0 0.0
    %286 = vmatpush1.xpose.msra.mxu0 0.0
    %287 = vmatprep.subr.mxu0 0.0
    %288 = vmatpush1.xpose.msra.mxu0 0.0
    %289 = vmatprep.subr.mxu0 0.0
    %290 = vmatpush1.xpose.msra.mxu0 0.0
    %291 = vmatprep.subr.mxu0 0.0
    %292 = vmatpush1.xpose.msra.mxu0 0.0
    %293 = vmatprep.subr.mxu0 0.0
    %294 = vmatpush1.xpose.msra.mxu0 0.0
    %295 = vmatprep.subr.mxu0 0.0
    %296 = vmatpush1.xpose.msra.mxu0 0.0
    %297 = vmatprep.subr.mxu0 0.0
    %298 = vmatpush1.xpose.msra.mxu0 0.0
    %299 = vmatprep.subr.mxu0 0.0
    %300 = vmatpush1.xpose.msra.mxu0 0.0
    %301 = vmatprep.subr.mxu0 0.0
    %302 = vmatpush1.xpose.msra.mxu0 0.0
    %303 = vmatprep.subr.mxu0 0.0
    %304 = vmatpush1.xpose.msra.mxu0 0.0
    %305 = vmatprep.mubr.f32.mxu0 0.0
    %306 = vmatmul.mubr.f32.gmra.mrb[0].mxu0 %v225
    %v307 = vpop.f32.mrb[0].mxu0
    %v308 = vadd.f32 %v97, %v307
    %v309 = vpop.f32.mrb[0].mxu0
    %310 = vmatprep.mubr.f32.mxu0 0.0
    %311 = vmatmul.mubr.f32.gmra.mrb[0].mxu0 %v227
    %v312 = vpop.f32.mrb[0].mxu0
    %v313 = vadd.f32 %v98, %v312
    %v314 = vpop.f32.mrb[0].mxu0
    %315 = vmatprep.mubr.f32.mxu0 0.0
    %316 = vmatmul.mubr.f32.gmra.mrb[0].mxu0 %v229
    %v317 = vpop.f32.mrb[0].mxu0
    %v318 = vadd.f32 %v99, %v317
    %v319 = vpop.f32.mrb[0].mxu0
    %320 = vmatprep.mubr.f32.mxu0 0.0
    %321 = vmatmul.mubr.f32.gmra.mrb[0].mxu0 %v231
    %v322 = vpop.f32.mrb[0].mxu0
    %v323 = vadd.f32 %v100, %v322
    %v324 = vpop.f32.mrb[0].mxu0
    %325 = vdwg.mxu0
    %v326 = vsel %vm53, %v308, -inf
    %327 = vmax.xlane.f32.xlu0 %v326
    %v328 = vpop.xlane.xlu0 %327
    %v329 = vsel %vm53, %v313, -inf
    %330 = vmax.xlane.f32.xlu0 %v329
    %v331 = vpop.xlane.xlu0 %330
    %v332 = vsel %vm53, %v318, -inf
    %333 = vmax.xlane.f32.xlu0 %v332
    %v334 = vpop.xlane.xlu0 %333
    %v335 = vsel %vm53, %v323, -inf
    %336 = vmax.xlane.f32.xlu0 %v335
    %v337 = vpop.xlane.xlu0 %336
    %v338 = vsub.f32 %v308, %v328
    %v339 = vsub.f32 %v313, %v331
    %v340 = vsub.f32 %v318, %v334
    %v341 = vsub.f32 %v323, %v337
    %v342 = vmul.f32 %v338, 1.442695
    %v343 = vpow.pop %v342
    %v344 = vmul.f32 %v339, 1.442695
    %v345 = vpow.pop %v344
    %v346 = vmul.f32 %v340, 1.442695
    %v347 = vpow.pop %v346
    %v348 = vmul.f32 %v341, 1.442695
    %v349 = vpow.pop %v348
    %v350 = vsel %vm53, %v343, 0.0
    %351 = vadd.xlane.f32.xlu0 %v350
    %v352 = vpop.xlane.xlu0 %351
    %v353 = vsel %vm53, %v345, 0.0
    %354 = vadd.xlane.f32.xlu0 %v353
    %v355 = vpop.xlane.xlu0 %354
    %v356 = vsel %vm53, %v347, 0.0
    %357 = vadd.xlane.f32.xlu0 %v356
    %v358 = vpop.xlane.xlu0 %357
    %v359 = vsel %vm53, %v349, 0.0
    %360 = vadd.xlane.f32.xlu0 %v359
    %v361 = vpop.xlane.xlu0 %360
    %v362 = vrcp.pop %v352
    %v363 = vrcp.pop %v355
    %v364 = vrcp.pop %v358
    %v365 = vrcp.pop %v361
    %v366 = vmul.f32 %v343, %v362
    %v367 = vmul.f32 %v345, %v363
    %v368 = vmul.f32 %v347, %v364
    %v369 = vmul.f32 %v349, %v365
    %370 = vrot.lane.b32.xlu0 %v202, 96
    %v371 = vpop.permute.xlu0 %370
    %372 = vrot.lane.b32.xlu0 %v212, 96
    %v373 = vpop.permute.xlu0 %372
    %374 = vrot.lane.b32.xlu0 %v207, 96
    %v375 = vpop.permute.xlu0 %374
    %376 = vrot.lane.b32.xlu0 %v215, 96
    %v377 = vpop.permute.xlu0 %376
    %v383 = vsel %vm53, %v366, 0
    %v386 = vsel %vm53, %v367, 0
    %v389 = vsel %vm53, %v368, 0
    %v392 = vsel %vm53, %v369, 0
    %394 = vmatprep.subr.mxu0 0.0
    %395 = vmatpush1.msra.mxu0 %v371
    %396 = vmatprep.subr.mxu0 0.0
    %397 = vmatpush1.msra.mxu0 %v373
    %398 = vmatprep.subr.mxu0 0.0
    %399 = vmatpush1.msra.mxu0 %v375
    %400 = vmatprep.subr.mxu0 0.0
    %401 = vmatpush1.msra.mxu0 %v377
    %402 = vmatprep.subr.mxu0 0.0
    %403 = vmatpush1.msra.mxu0 0.0
    %404 = vmatprep.subr.mxu0 0.0
    %405 = vmatpush1.msra.mxu0 0.0
    %406 = vmatprep.subr.mxu0 0.0
    %407 = vmatpush1.msra.mxu0 0.0
    %408 = vmatprep.subr.mxu0 0.0
    %409 = vmatpush1.msra.mxu0 0.0
    %410 = vmatprep.subr.mxu0 0.0
    %411 = vmatpush1.msra.mxu0 0.0
    %412 = vmatprep.subr.mxu0 0.0
    %413 = vmatpush1.msra.mxu0 0.0
    %414 = vmatprep.subr.mxu0 0.0
    %415 = vmatpush1.msra.mxu0 0.0
    %416 = vmatprep.subr.mxu0 0.0
    %417 = vmatpush1.msra.mxu0 0.0
    %418 = vmatprep.subr.mxu0 0.0
    %419 = vmatpush1.msra.mxu0 0.0
    %420 = vmatprep.subr.mxu0 0.0
    %421 = vmatpush1.msra.mxu0 0.0
    %422 = vmatprep.subr.mxu0 0.0
    %423 = vmatpush1.msra.mxu0 0.0
    %424 = vmatprep.subr.mxu0 0.0
    %425 = vmatpush1.msra.mxu0 0.0
    %426 = vmatprep.subr.mxu0 0.0
    %427 = vmatpush1.msra.mxu0 0.0
    %428 = vmatprep.subr.mxu0 0.0
    %429 = vmatpush1.msra.mxu0 0.0
    %430 = vmatprep.subr.mxu0 0.0
    %431 = vmatpush1.msra.mxu0 0.0
    %432 = vmatprep.subr.mxu0 0.0
    %433 = vmatpush1.msra.mxu0 0.0
    %434 = vmatprep.subr.mxu0 0.0
    %435 = vmatpush1.msra.mxu0 0.0
    %436 = vmatprep.subr.mxu0 0.0
    %437 = vmatpush1.msra.mxu0 0.0
    %438 = vmatprep.subr.mxu0 0.0
    %439 = vmatpush1.msra.mxu0 0.0
    %440 = vmatprep.subr.mxu0 0.0
    %441 = vmatpush1.msra.mxu0 0.0
    %442 = vmatprep.subr.mxu0 0.0
    %443 = vmatpush1.msra.mxu0 0.0
    %444 = vmatprep.subr.mxu0 0.0
    %445 = vmatpush1.msra.mxu0 0.0
    %446 = vmatprep.subr.mxu0 0.0
    %447 = vmatpush1.msra.mxu0 0.0
    %448 = vmatprep.subr.mxu0 0.0
    %449 = vmatpush1.msra.mxu0 0.0
    %450 = vmatprep.subr.mxu0 0.0
    %451 = vmatpush1.msra.mxu0 0.0
    %452 = vmatprep.subr.mxu0 0.0
    %453 = vmatpush1.msra.mxu0 0.0
    %454 = vmatprep.subr.mxu0 0.0
    %455 = vmatpush1.msra.mxu0 0.0
    %456 = vmatprep.subr.mxu0 0.0
    %457 = vmatpush1.msra.mxu0 0.0
    %458 = vmatprep.mubr.f32.mxu0 0.0
    %459 = vmatmul.mubr.f32.gmra.mrb[0].mxu0 %v383
    %v460 = vpop.f32.mrb[0].mxu0
    %v461 = vadd.f32 0.0, %v460
    %v462 = vpop.f32.mrb[0].mxu0
    %463 = vmatprep.mubr.f32.mxu0 0.0
    %464 = vmatmul.mubr.f32.gmra.mrb[0].mxu0 %v386
    %v465 = vpop.f32.mrb[0].mxu0
    %v466 = vadd.f32 0.0, %v465
    %v467 = vpop.f32.mrb[0].mxu0
    %468 = vmatprep.mubr.f32.mxu0 0.0
    %469 = vmatmul.mubr.f32.gmra.mrb[0].mxu0 %v389
    %v470 = vpop.f32.mrb[0].mxu0
    %v471 = vadd.f32 0.0, %v470
    %v472 = vpop.f32.mrb[0].mxu0
    %473 = vmatprep.mubr.f32.mxu0 0.0
    %474 = vmatmul.mubr.f32.gmra.mrb[0].mxu0 %v392
    %v475 = vpop.f32.mrb[0].mxu0
    %v476 = vadd.f32 0.0, %v475
    %v477 = vpop.f32.mrb[0].mxu0
    %478 = vdwg.mxu0
    %480 = vrot.lane.b32.xlu0 %v466, 16
    %v481 = vpop.permute.xlu0 %480
    %v483 = vsel %vm224, %v461, %v481
    %485 = vrot.lane.b32.xlu0 %v476, 16
    %v486 = vpop.permute.xlu0 %485
    %v488 = vsel %vm224, %v471, %v486
    %v489 = vlaneseq
    %v490 = vshrl.u32 %v489, 7
    %v491 = vsub.s32 0, %v490
    %v492 = vrot.slane %v102, %v491
    %497 = vrot.lane.b32.xlu0 %v109, 32
    %v498 = vpop.permute.xlu0 %497
    %499 = vrot.lane.b32.xlu0 %v110, 32
    %v500 = vpop.permute.xlu0 %499
    %501 = vrot.lane.b32.xlu0 %v111, 32
    %v502 = vpop.permute.xlu0 %501
    %503 = vrot.lane.b32.xlu0 %v112, 32
    %v504 = vpop.permute.xlu0 %503
    %v510 = vsel %vm53, %v483, 0
    %v513 = vsel %vm53, %v488, 0
    %515 = vmatprep.subr.mxu0 0.0
    %516 = vmatpush1.msra.mxu0 %v498
    %517 = vmatprep.subr.mxu0 0.0
    %518 = vmatpush1.msra.mxu0 %v500
    %519 = vmatprep.subr.mxu0 0.0
    %520 = vmatpush1.msra.mxu0 %v502
    %521 = vmatprep.subr.mxu0 0.0
    %522 = vmatpush1.msra.mxu0 %v504
    %523 = vmatprep.subr.mxu0 0.0
    %524 = vmatpush1.msra.mxu0 0.0
    %525 = vmatprep.subr.mxu0 0.0
    %526 = vmatpush1.msra.mxu0 0.0
    %527 = vmatprep.subr.mxu0 0.0
    %528 = vmatpush1.msra.mxu0 0.0
    %529 = vmatprep.subr.mxu0 0.0
    %530 = vmatpush1.msra.mxu0 0.0
    %531 = vmatprep.subr.mxu0 0.0
    %532 = vmatpush1.msra.mxu0 0.0
    %533 = vmatprep.subr.mxu0 0.0
    %534 = vmatpush1.msra.mxu0 0.0
    %535 = vmatprep.subr.mxu0 0.0
    %536 = vmatpush1.msra.mxu0 0.0
    %537 = vmatprep.subr.mxu0 0.0
    %538 = vmatpush1.msra.mxu0 0.0
    %539 = vmatprep.subr.mxu0 0.0
    %540 = vmatpush1.msra.mxu0 0.0
    %541 = vmatprep.subr.mxu0 0.0
    %542 = vmatpush1.msra.mxu0 0.0
    %543 = vmatprep.subr.mxu0 0.0
    %544 = vmatpush1.msra.mxu0 0.0
    %545 = vmatprep.subr.mxu0 0.0
    %546 = vmatpush1.msra.mxu0 0.0
    %547 = vmatprep.subr.mxu0 0.0
    %548 = vmatpush1.msra.mxu0 0.0
    %549 = vmatprep.subr.mxu0 0.0
    %550 = vmatpush1.msra.mxu0 0.0
    %551 = vmatprep.subr.mxu0 0.0
    %552 = vmatpush1.msra.mxu0 0.0
    %553 = vmatprep.subr.mxu0 0.0
    %554 = vmatpush1.msra.mxu0 0.0
    %555 = vmatprep.subr.mxu0 0.0
    %556 = vmatpush1.msra.mxu0 0.0
    %557 = vmatprep.subr.mxu0 0.0
    %558 = vmatpush1.msra.mxu0 0.0
    %559 = vmatprep.subr.mxu0 0.0
    %560 = vmatpush1.msra.mxu0 0.0
    %561 = vmatprep.subr.mxu0 0.0
    %562 = vmatpush1.msra.mxu0 0.0
    %563 = vmatprep.subr.mxu0 0.0
    %564 = vmatpush1.msra.mxu0 0.0
    %565 = vmatprep.subr.mxu0 0.0
    %566 = vmatpush1.msra.mxu0 0.0
    %567 = vmatprep.subr.mxu0 0.0
    %568 = vmatpush1.msra.mxu0 0.0
    %569 = vmatprep.subr.mxu0 0.0
    %570 = vmatpush1.msra.mxu0 0.0
    %571 = vmatprep.subr.mxu0 0.0
    %572 = vmatpush1.msra.mxu0 0.0
    %573 = vmatprep.subr.mxu0 0.0
    %574 = vmatpush1.msra.mxu0 0.0
    %575 = vmatprep.subr.mxu0 0.0
    %576 = vmatpush1.msra.mxu0 0.0
    %577 = vmatprep.subr.mxu0 0.0
    %578 = vmatpush1.msra.mxu0 0.0
    %579 = vmatprep.mubr.f32.mxu0 0.0
    %580 = vmatmul.mubr.f32.gmra.mrb[0].mxu0 %v510
    %v581 = vpop.f32.mrb[0].mxu0
    %v582 = vadd.f32 %v492, %v581
    %v583 = vpop.f32.mrb[0].mxu0
    %584 = vmatprep.mubr.f32.mxu0 0.0
    %585 = vmatmul.mubr.f32.gmra.mrb[0].mxu0 %v513
    %v586 = vpop.f32.mrb[0].mxu0
    %v587 = vadd.f32 %v492, %v586
    %v588 = vpop.f32.mrb[0].mxu0
    %589 = vdwg.mxu0
    %v590 = vadd.f32 %v582, %v95
    %v591 = vadd.f32 %v587, %v96
    %v592 = vsel %vm53, %v590, 0.0
    %593 = vadd.xlane.f32.xlu0 %v592
    %v594 = vpop.xlane.xlu0 %593
    %v595 = vsel %vm53, %v591, 0.0
    %596 = vadd.xlane.f32.xlu0 %v595
    %v597 = vpop.xlane.xlu0 %596
    %v598 = vmul.f32 %v594, %v60
    %v599 = vmul.f32 %v597, %v60
    %v600 = vmul.f32 %v590, %v590
    %v601 = vmul.f32 %v591, %v591
    %v602 = vsel %vm53, %v600, 0.0
    %603 = vadd.xlane.f32.xlu0 %v602
    %v604 = vpop.xlane.xlu0 %603
    %v605 = vsel %vm53, %v601, 0.0
    %606 = vadd.xlane.f32.xlu0 %v605
    %v607 = vpop.xlane.xlu0 %606
    %v608 = vmul.f32 %v604, %v60
    %v609 = vmul.f32 %v607, %v60
    %v610 = vmul.f32 %v598, %v598
    %v611 = vmul.f32 %v599, %v599
    %v612 = vsub.f32 %v608, %v610
    %v613 = vsub.f32 %v609, %v611
    %v614 = vsub.f32 %v590, %v598
    %v615 = vsub.f32 %v591, %v599
    %v616 = vadd.f32 %v612, 1e-12
    %v617 = vadd.f32 %v613, 1e-12
    %v618 = vrsqrt.pop %v616
    %v619 = vrsqrt.pop %v617
    %v620 = vmul.f32 %v614, %v618
    %v621 = vmul.f32 %v615, %v619
    %v622 = vlaneseq
    %v623 = vshrl.u32 %v622, 7
    %v624 = vsub.s32 0, %v623
    %v625 = vrot.slane %v103, %v624
    %v626 = vmul.f32 %v620, %v625
    %v627 = vmul.f32 %v621, %v625
    %v628 = vlaneseq
    %v629 = vshrl.u32 %v628, 7
    %v630 = vsub.s32 0, %v629
    %v631 = vrot.slane %v104, %v630
    %v632 = vadd.f32 %v626, %v631
    %v633 = vadd.f32 %v627, %v631
    %v634 = vlaneseq
    %v635 = vshrl.u32 %v634, 7
    %v636 = vsub.s32 0, %v635
    %v637 = vrot.slane %v105, %v636
    %v639 = vsel %vm53, %v632, 0
    %v642 = vsel %vm53, %v633, 0
    %644 = vmatprep.subr.mxu0 0.0
    %645 = vmatpush1.msra.mxu0 %v113
    %646 = vmatprep.subr.mxu0 0.0
    %647 = vmatpush1.msra.mxu0 %v114
    %648 = vmatprep.subr.mxu0 0.0
    %649 = vmatpush1.msra.mxu0 %v115
    %650 = vmatprep.subr.mxu0 0.0
    %651 = vmatpush1.msra.mxu0 %v116
    %652 = vmatprep.subr.mxu0 0.0
    %653 = vmatpush1.msra.mxu0 0.0
    %654 = vmatprep.subr.mxu0 0.0
    %655 = vmatpush1.msra.mxu0 0.0
    %656 = vmatprep.subr.mxu0 0.0
    %657 = vmatpush1.msra.mxu0 0.0
    %658 = vmatprep.subr.mxu0 0.0
    %659 = vmatpush1.msra.mxu0 0.0
    %660 = vmatprep.subr.mxu0 0.0
    %661 = vmatpush1.msra.mxu0 0.0
    %662 = vmatprep.subr.mxu0 0.0
    %663 = vmatpush1.msra.mxu0 0.0
    %664 = vmatprep.subr.mxu0 0.0
    %665 = vmatpush1.msra.mxu0 0.0
    %666 = vmatprep.subr.mxu0 0.0
    %667 = vmatpush1.msra.mxu0 0.0
    %668 = vmatprep.subr.mxu0 0.0
    %669 = vmatpush1.msra.mxu0 0.0
    %670 = vmatprep.subr.mxu0 0.0
    %671 = vmatpush1.msra.mxu0 0.0
    %672 = vmatprep.subr.mxu0 0.0
    %673 = vmatpush1.msra.mxu0 0.0
    %674 = vmatprep.subr.mxu0 0.0
    %675 = vmatpush1.msra.mxu0 0.0
    %676 = vmatprep.subr.mxu0 0.0
    %677 = vmatpush1.msra.mxu0 0.0
    %678 = vmatprep.subr.mxu0 0.0
    %679 = vmatpush1.msra.mxu0 0.0
    %680 = vmatprep.subr.mxu0 0.0
    %681 = vmatpush1.msra.mxu0 0.0
    %682 = vmatprep.subr.mxu0 0.0
    %683 = vmatpush1.msra.mxu0 0.0
    %684 = vmatprep.subr.mxu0 0.0
    %685 = vmatpush1.msra.mxu0 0.0
    %686 = vmatprep.subr.mxu0 0.0
    %687 = vmatpush1.msra.mxu0 0.0
    %688 = vmatprep.subr.mxu0 0.0
    %689 = vmatpush1.msra.mxu0 0.0
    %690 = vmatprep.subr.mxu0 0.0
    %691 = vmatpush1.msra.mxu0 0.0
    %692 = vmatprep.subr.mxu0 0.0
    %693 = vmatpush1.msra.mxu0 0.0
    %694 = vmatprep.subr.mxu0 0.0
    %695 = vmatpush1.msra.mxu0 0.0
    %696 = vmatprep.subr.mxu0 0.0
    %697 = vmatpush1.msra.mxu0 0.0
    %698 = vmatprep.subr.mxu0 0.0
    %699 = vmatpush1.msra.mxu0 0.0
    %700 = vmatprep.subr.mxu0 0.0
    %701 = vmatpush1.msra.mxu0 0.0
    %702 = vmatprep.subr.mxu0 0.0
    %703 = vmatpush1.msra.mxu0 0.0
    %704 = vmatprep.subr.mxu0 0.0
    %705 = vmatpush1.msra.mxu0 0.0
    %706 = vmatprep.subr.mxu0 0.0
    %707 = vmatpush1.msra.mxu0 0.0
    %708 = vmatprep.mubr.f32.mxu0 0.0
    %709 = vmatmul.mubr.f32.gmra.mrb[0].mxu0 %v639
    %v710 = vpop.f32.mrb[0].mxu0
    %v711 = vadd.f32 %v637, %v710
    %v712 = vpop.f32.mrb[0].mxu0
    %713 = vmatprep.mubr.f32.mxu0 0.0
    %714 = vmatmul.mubr.f32.gmra.mrb[0].mxu0 %v642
    %v715 = vpop.f32.mrb[0].mxu0
    %v716 = vadd.f32 %v637, %v715
    %v717 = vpop.f32.mrb[0].mxu0
    %718 = vdwg.mxu0
    %v719 = vmul.f32 %v711, %v711
    %v720 = vmul.f32 %v716, %v716
    %v721 = vmul.f32 %v711, %v719
    %v722 = vmul.f32 %v716, %v720
    %v723 = vmul.f32 %v721, 0.044715
    %v724 = vmul.f32 %v722, 0.044715
    %v725 = vadd.f32 %v711, %v723
    %v726 = vadd.f32 %v716, %v724
    %v727 = vmul.f32 %v725, 0.7978846
    %v728 = vmul.f32 %v726, 0.7978846
    %v729 = vtanh.pop %v727
    %v730 = vtanh.pop %v728
    %v731 = vadd.f32 %v729, 1.0
    %v732 = vadd.f32 %v730, 1.0
    %v733 = vmul.f32 %v731, 0.5
    %v734 = vmul.f32 %v732, 0.5
    %v735 = vmul.f32 %v711, %v733
    %v736 = vmul.f32 %v716, %v734
    %v737 = vlaneseq
    %v738 = vshrl.u32 %v737, 7
    %v739 = vsub.s32 0, %v738
    %v740 = vrot.slane %v106, %v739
    %vm741 = vcmask 523264
    %v743 = vsel %vm741, %v735, 0
    %v746 = vsel %vm741, %v736, 0
    %748 = vmatprep.subr.mxu0 0.0
    %749 = vmatpush1.msra.mxu0 %v117
    %750 = vmatprep.subr.mxu0 0.0
    %751 = vmatpush1.msra.mxu0 %v118
    %752 = vmatprep.subr.mxu0 0.0
    %753 = vmatpush1.msra.mxu0 %v119
    %754 = vmatprep.subr.mxu0 0.0
    %755 = vmatpush1.msra.mxu0 %v120
    %756 = vmatprep.subr.mxu0 0.0
    %757 = vmatpush1.msra.mxu0 %v121
    %758 = vmatprep.subr.mxu0 0.0
    %759 = vmatpush1.msra.mxu0 %v122
    %760 = vmatprep.subr.mxu0 0.0
    %761 = vmatpush1.msra.mxu0 %v123
    %762 = vmatprep.subr.mxu0 0.0
    %763 = vmatpush1.msra.mxu0 %v124
    %764 = vmatprep.subr.mxu0 0.0
    %765 = vmatpush1.msra.mxu0 0.0
    %766 = vmatprep.subr.mxu0 0.0
    %767 = vmatpush1.msra.mxu0 0.0
    %768 = vmatprep.subr.mxu0 0.0
    %769 = vmatpush1.msra.mxu0 0.0
    %770 = vmatprep.subr.mxu0 0.0
    %771 = vmatpush1.msra.mxu0 0.0
    %772 = vmatprep.subr.mxu0 0.0
    %773 = vmatpush1.msra.mxu0 0.0
    %774 = vmatprep.subr.mxu0 0.0
    %775 = vmatpush1.msra.mxu0 0.0
    %776 = vmatprep.subr.mxu0 0.0
    %777 = vmatpush1.msra.mxu0 0.0
    %778 = vmatprep.subr.mxu0 0.0
    %779 = vmatpush1.msra.mxu0 0.0
    %780 = vmatprep.subr.mxu0 0.0
    %781 = vmatpush1.msra.mxu0 0.0
    %782 = vmatprep.subr.mxu0 0.0
    %783 = vmatpush1.msra.mxu0 0.0
    %784 = vmatprep.subr.mxu0 0.0
    %785 = vmatpush1.msra.mxu0 0.0
    %786 = vmatprep.subr.mxu0 0.0
    %787 = vmatpush1.msra.mxu0 0.0
    %788 = vmatprep.subr.mxu0 0.0
    %789 = vmatpush1.msra.mxu0 0.0
    %790 = vmatprep.subr.mxu0 0.0
    %791 = vmatpush1.msra.mxu0 0.0
    %792 = vmatprep.subr.mxu0 0.0
    %793 = vmatpush1.msra.mxu0 0.0
    %794 = vmatprep.subr.mxu0 0.0
    %795 = vmatpush1.msra.mxu0 0.0
    %796 = vmatprep.subr.mxu0 0.0
    %797 = vmatpush1.msra.mxu0 0.0
    %798 = vmatprep.subr.mxu0 0.0
    %799 = vmatpush1.msra.mxu0 0.0
    %800 = vmatprep.subr.mxu0 0.0
    %801 = vmatpush1.msra.mxu0 0.0
    %802 = vmatprep.subr.mxu0 0.0
    %803 = vmatpush1.msra.mxu0 0.0
    %804 = vmatprep.subr.mxu0 0.0
    %805 = vmatpush1.msra.mxu0 0.0
    %806 = vmatprep.subr.mxu0 0.0
    %807 = vmatpush1.msra.mxu0 0.0
    %808 = vmatprep.subr.mxu0 0.0
    %809 = vmatpush1.msra.mxu0 0.0
    %810 = vmatprep.subr.mxu0 0.0
    %811 = vmatpush1.msra.mxu0 0.0
    %812 = vmatprep.mubr.f32.mxu0 0.0
    %813 = vmatmul.mubr.f32.gmra.mrb[0].mxu0 %v743
    %v814 = vpop.f32.mrb[0].mxu0
    %v815 = vadd.f32 %v740, %v814
    %v816 = vpop.f32.mrb[0].mxu0
    %817 = vmatprep.mubr.f32.mxu0 0.0
    %818 = vmatmul.mubr.f32.gmra.mrb[0].mxu0 %v746
    %v819 = vpop.f32.mrb[0].mxu0
    %v820 = vadd.f32 %v740, %v819
    %v821 = vpop.f32.mrb[0].mxu0
    %822 = vdwg.mxu0
    %v823 = vadd.f32 %v815, %v632
    %v824 = vadd.f32 %v820, %v633
    %v825 = vsel %vm53, %v823, 0.0
    %826 = vadd.xlane.f32.xlu0 %v825
    %v827 = vpop.xlane.xlu0 %826
    %v828 = vsel %vm53, %v824, 0.0
    %829 = vadd.xlane.f32.xlu0 %v828
    %v830 = vpop.xlane.xlu0 %829
    %v831 = vmul.f32 %v827, %v60
    %v832 = vmul.f32 %v830, %v60
    %v833 = vmul.f32 %v823, %v823
    %v834 = vmul.f32 %v824, %v824
    %v835 = vsel %vm53, %v833, 0.0
    %836 = vadd.xlane.f32.xlu0 %v835
    %v837 = vpop.xlane.xlu0 %836
    %v838 = vsel %vm53, %v834, 0.0
    %839 = vadd.xlane.f32.xlu0 %v838
    %v840 = vpop.xlane.xlu0 %839
    %v841 = vmul.f32 %v837, %v60
    %v842 = vmul.f32 %v840, %v60
    %v843 = vmul.f32 %v831, %v831
    %v844 = vmul.f32 %v832, %v832
    %v845 = vsub.f32 %v841, %v843
    %v846 = vsub.f32 %v842, %v844
    %v847 = vsub.f32 %v823, %v831
    %v848 = vsub.f32 %v824, %v832
    %v849 = vadd.f32 %v845, 1e-12
    %v850 = vadd.f32 %v846, 1e-12
    %v851 = vrsqrt.pop %v849
    %v852 = vrsqrt.pop %v850
    %v853 = vmul.f32 %v847, %v851
    %v854 = vmul.f32 %v848, %v852
    %v855 = vlaneseq
    %v856 = vshrl.u32 %v855, 7
    %v857 = vsub.s32 0, %v856
    %v858 = vrot.slane %v107, %v857
    %v859 = vmul.f32 %v853, %v858
    %v860 = vmul.f32 %v854, %v858
    %v861 = vlaneseq
    %v862 = vshrl.u32 %v861, 7
    %v863 = vsub.s32 0, %v862
    %v864 = vrot.slane %v108, %v863
    %v865 = vadd.f32 %v859, %v864
    %v866 = vadd.f32 %v860, %v864
    %v867 = vld [vmem:[#allocation5 + $0xa] sm:$0x1]
    %v868 = vld [vmem:[#allocation5 + $0xb] sm:$0x1]
    %v869 = vld [vmem:[#allocation5 + $0xc] sm:$0x1]
    %v870 = vld [vmem:[#allocation5 + $0xd] sm:$0x1]
    %v871 = vld [vmem:[#allocation5 + $0xe] sm:$0x1]
    %v872 = vld [vmem:[#allocation5 + $0xf] sm:$0x1]
    %v873 = vld [vmem:[#allocation5 + $0x10] sm:$0x1]
    %v874 = vld [vmem:[#allocation5 + $0x11] sm:$0x1]
    %v875 = vld [vmem:[%s3 + $0x40] sm:$0xff]
    %v876 = vld [vmem:[%s3 + $0x50] sm:$0xff]
    %v877 = vld [vmem:[%s3 + $0x60] sm:$0xff]
    %v878 = vld [vmem:[%s3 + $0x70] sm:$0xff]
    %v879 = vld [vmem:[%s3 + $0x48] sm:$0xff]
    %v880 = vld [vmem:[%s3 + $0x58] sm:$0xff]
    %v881 = vld [vmem:[%s3 + $0x68] sm:$0xff]
    %v882 = vld [vmem:[%s3 + $0x78] sm:$0xff]
    %v883 = vld [vmem:[%s4 + $0x40] sm:$0xff]
    %v884 = vld [vmem:[%s4 + $0x48] sm:$0xff]
    %v885 = vld [vmem:[%s4 + $0x50] sm:$0xff]
    %v886 = vld [vmem:[%s4 + $0x58] sm:$0xff]
    %v887 = vld [vmem:[%s4 + $0x60] sm:$0xff]
    %v888 = vld [vmem:[%s4 + $0x68] sm:$0xff]
    %v889 = vld [vmem:[%s4 + $0x70] sm:$0xff]
    %v890 = vld [vmem:[%s4 + $0x78] sm:$0xff]
    %v891 = vlaneseq
    %v892 = vshrl.u32 %v891, 7
    %v893 = vsub.s32 0, %v892
    %v894 = vrot.slane %v867, %v893
    %v896 = vsel %vm53, %v865, 0
    %v899 = vsel %vm53, %v866, 0
    %901 = vmatprep.subr.mxu0 0.0
    %902 = vmatpush1.msra.mxu0 %v875
    %903 = vmatprep.subr.mxu0 0.0
    %904 = vmatpush1.msra.mxu0 %v876
    %905 = vmatprep.subr.mxu0 0.0
    %906 = vmatpush1.msra.mxu0 %v877
    %907 = vmatprep.subr.mxu0 0.0
    %908 = vmatpush1.msra.mxu0 %v878
    %909 = vmatprep.subr.mxu0 0.0
    %910 = vmatpush1.msra.mxu0 0.0
    %911 = vmatprep.subr.mxu0 0.0
    %912 = vmatpush1.msra.mxu0 0.0
    %913 = vmatprep.subr.mxu0 0.0
    %914 = vmatpush1.msra.mxu0 0.0
    %915 = vmatprep.subr.mxu0 0.0
    %916 = vmatpush1.msra.mxu0 0.0
    %917 = vmatprep.subr.mxu0 0.0
    %918 = vmatpush1.msra.mxu0 0.0
    %919 = vmatprep.subr.mxu0 0.0
    %920 = vmatpush1.msra.mxu0 0.0
    %921 = vmatprep.subr.mxu0 0.0
    %922 = vmatpush1.msra.mxu0 0.0
    %923 = vmatprep.subr.mxu0 0.0
    %924 = vmatpush1.msra.mxu0 0.0
    %925 = vmatprep.subr.mxu0 0.0
    %926 = vmatpush1.msra.mxu0 0.0
    %927 = vmatprep.subr.mxu0 0.0
    %928 = vmatpush1.msra.mxu0 0.0
    %929 = vmatprep.subr.mxu0 0.0
    %930 = vmatpush1.msra.mxu0 0.0
    %931 = vmatprep.subr.mxu0 0.0
    %932 = vmatpush1.msra.mxu0 0.0
    %933 = vmatprep.subr.mxu0 0.0
    %934 = vmatpush1.msra.mxu0 0.0
    %935 = vmatprep.subr.mxu0 0.0
    %936 = vmatpush1.msra.mxu0 0.0
    %937 = vmatprep.subr.mxu0 0.0
    %938 = vmatpush1.msra.mxu0 0.0
    %939 = vmatprep.subr.mxu0 0.0
    %940 = vmatpush1.msra.mxu0 0.0
    %941 = vmatprep.subr.mxu0 0.0
    %942 = vmatpush1.msra.mxu0 0.0
    %943 = vmatprep.subr.mxu0 0.0
    %944 = vmatpush1.msra.mxu0 0.0
    %945 = vmatprep.subr.mxu0 0.0
    %946 = vmatpush1.msra.mxu0 0.0
    %947 = vmatprep.subr.mxu0 0.0
    %948 = vmatpush1.msra.mxu0 0.0
    %949 = vmatprep.subr.mxu0 0.0
    %950 = vmatpush1.msra.mxu0 0.0
    %951 = vmatprep.subr.mxu0 0.0
    %952 = vmatpush1.msra.mxu0 0.0
    %953 = vmatprep.subr.mxu0 0.0
    %954 = vmatpush1.msra.mxu0 0.0
    %955 = vmatprep.subr.mxu0 0.0
    %956 = vmatpush1.msra.mxu0 0.0
    %957 = vmatprep.subr.mxu0 0.0
    %958 = vmatpush1.msra.mxu0 0.0
    %959 = vmatprep.subr.mxu0 0.0
    %960 = vmatpush1.msra.mxu0 0.0
    %961 = vmatprep.subr.mxu0 0.0
    %962 = vmatpush1.msra.mxu0 0.0
    %963 = vmatprep.subr.mxu0 0.0
    %964 = vmatpush1.msra.mxu0 0.0
    %965 = vmatprep.mubr.f32.mxu0 0.0
    %966 = vmatmul.mubr.f32.gmra.mrb[0].mxu0 %v896
    %v967 = vpop.f32.mrb[0].mxu0
    %v968 = vadd.f32 %v894, %v967
    %v969 = vpop.f32.mrb[0].mxu0
    %970 = vmatprep.mubr.f32.mxu0 0.0
    %971 = vmatmul.mubr.f32.gmra.mrb[0].mxu0 %v899
    %v972 = vpop.f32.mrb[0].mxu0
    %v973 = vadd.f32 %v894, %v972
    %v974 = vpop.f32.mrb[0].mxu0
    %975 = vdwg.mxu0
    %977 = vrot.lane.b32.xlu0 %v968, 80
    %v978 = vpop.permute.xlu0 %977
    %980 = vrot.lane.b32.xlu0 %v973, 80
    %v981 = vpop.permute.xlu0 %980
    %982 = vrot.lane.b32.xlu0 %v968, 112
    %v983 = vpop.permute.xlu0 %982
    %984 = vrot.lane.b32.xlu0 %v978, 112
    %v985 = vpop.permute.xlu0 %984
    %986 = vrot.lane.b32.xlu0 %v973, 112
    %v987 = vpop.permute.xlu0 %986
    %988 = vrot.lane.b32.xlu0 %v981, 112
    %v989 = vpop.permute.xlu0 %988
    %v990 = vsel %vm224, %v968, 0
    %v992 = vsel %vm224, %v978, 0
    %v994 = vsel %vm224, %v973, 0
    %v996 = vsel %vm224, %v981, 0
    %v998 = vsel %vm224, %v983, 0
    %v1000 = vsel %vm224, %v985, 0
    %v1002 = vsel %vm224, %v987, 0
    %v1004 = vsel %vm224, %v989, 0
    %1006 = vmatprep.subr.mxu0 0.0
    %1007 = vmatpush1.xpose.msra.mxu0 %v998
    %1008 = vmatprep.subr.mxu0 0.0
    %1009 = vmatpush1.xpose.msra.mxu0 %v1000
    %1010 = vmatprep.subr.mxu0 0.0
    %1011 = vmatpush1.xpose.msra.mxu0 %v1002
    %1012 = vmatprep.subr.mxu0 0.0
    %1013 = vmatpush1.xpose.msra.mxu0 %v1004
    %1014 = vmatprep.subr.mxu0 0.0
    %1015 = vmatpush1.xpose.msra.mxu0 0.0
    %1016 = vmatprep.subr.mxu0 0.0
    %1017 = vmatpush1.xpose.msra.mxu0 0.0
    %1018 = vmatprep.subr.mxu0 0.0
    %1019 = vmatpush1.xpose.msra.mxu0 0.0
    %1020 = vmatprep.subr.mxu0 0.0
    %1021 = vmatpush1.xpose.msra.mxu0 0.0
    %1022 = vmatprep.subr.mxu0 0.0
    %1023 = vmatpush1.xpose.msra.mxu0 0.0
    %1024 = vmatprep.subr.mxu0 0.0
    %1025 = vmatpush1.xpose.msra.mxu0 0.0
    %1026 = vmatprep.subr.mxu0 0.0
    %1027 = vmatpush1.xpose.msra.mxu0 0.0
    %1028 = vmatprep.subr.mxu0 0.0
    %1029 = vmatpush1.xpose.msra.mxu0 0.0
    %1030 = vmatprep.subr.mxu0 0.0
    %1031 = vmatpush1.xpose.msra.mxu0 0.0
    %1032 = vmatprep.subr.mxu0 0.0
    %1033 = vmatpush1.xpose.msra.mxu0 0.0
    %1034 = vmatprep.subr.mxu0 0.0
    %1035 = vmatpush1.xpose.msra.mxu0 0.0
    %1036 = vmatprep.subr.mxu0 0.0
    %1037 = vmatpush1.xpose.msra.mxu0 0.0
    %1038 = vmatprep.subr.mxu0 0.0
    %1039 = vmatpush1.xpose.msra.mxu0 0.0
    %1040 = vmatprep.subr.mxu0 0.0
    %1041 = vmatpush1.xpose.msra.mxu0 0.0
    %1042 = vmatprep.subr.mxu0 0.0
    %1043 = vmatpush1.xpose.msra.mxu0 0.0
    %1044 = vmatprep.subr.mxu0 0.0
    %1045 = vmatpush1.xpose.msra.mxu0 0.0
    %1046 = vmatprep.subr.mxu0 0.0
    %1047 = vmatpush1.xpose.msra.mxu0 0.0
    %1048 = vmatprep.subr.mxu0 0.0
    %1049 = vmatpush1.xpose.msra.mxu0 0.0
    %1050 = vmatprep.subr.mxu0 0.0
    %1051 = vmatpush1.xpose.msra.mxu0 0.0
    %1052 = vmatprep.subr.mxu0 0.0
    %1053 = vmatpush1.xpose.msra.mxu0 0.0
    %1054 = vmatprep.subr.mxu0 0.0
    %1055 = vmatpush1.xpose.msra.mxu0 0.0
    %1056 = vmatprep.subr.mxu0 0.0
    %1057 = vmatpush1.xpose.msra.mxu0 0.0
    %1058 = vmatprep.subr.mxu0 0.0
    %1059 = vmatpush1.xpose.msra.mxu0 0.0
    %1060 = vmatprep.subr.mxu0 0.0
    %1061 = vmatpush1.xpose.msra.mxu0 0.0
    %1062 = vmatprep.subr.mxu0 0.0
    %1063 = vmatpush1.xpose.msra.mxu0 0.0
    %1064 = vmatprep.subr.mxu0 0.0
    %1065 = vmatpush1.xpose.msra.mxu0 0.0
    %1066 = vmatprep.subr.mxu0 0.0
    %1067 = vmatpush1.xpose.msra.mxu0 0.0
    %1068 = vmatprep.subr.mxu0 0.0
    %1069 = vmatpush1.xpose.msra.mxu0 0.0
    %1070 = vmatprep.mubr.f32.mxu0 0.0
    %1071 = vmatmul.mubr.f32.gmra.mrb[0].mxu0 %v990
    %v1072 = vpop.f32.mrb[0].mxu0
    %v1073 = vadd.f32 %v97, %v1072
    %v1074 = vpop.f32.mrb[0].mxu0
    %1075 = vmatprep.mubr.f32.mxu0 0.0
    %1076 = vmatmul.mubr.f32.gmra.mrb[0].mxu0 %v992
    %v1077 = vpop.f32.mrb[0].mxu0
    %v1078 = vadd.f32 %v98, %v1077
    %v1079 = vpop.f32.mrb[0].mxu0
    %1080 = vmatprep.mubr.f32.mxu0 0.0
    %1081 = vmatmul.mubr.f32.gmra.mrb[0].mxu0 %v994
    %v1082 = vpop.f32.mrb[0].mxu0
    %v1083 = vadd.f32 %v99, %v1082
    %v1084 = vpop.f32.mrb[0].mxu0
    %1085 = vmatprep.mubr.f32.mxu0 0.0
    %1086 = vmatmul.mubr.f32.gmra.mrb[0].mxu0 %v996
    %v1087 = vpop.f32.mrb[0].mxu0
    %v1088 = vadd.f32 %v100, %v1087
    %v1089 = vpop.f32.mrb[0].mxu0
    %1090 = vdwg.mxu0
    %v1091 = vsel %vm53, %v1073, -inf
    %1092 = vmax.xlane.f32.xlu0 %v1091
    %v1093 = vpop.xlane.xlu0 %1092
    %v1094 = vsel %vm53, %v1078, -inf
    %1095 = vmax.xlane.f32.xlu0 %v1094
    %v1096 = vpop.xlane.xlu0 %1095
    %v1097 = vsel %vm53, %v1083, -inf
    %1098 = vmax.xlane.f32.xlu0 %v1097
    %v1099 = vpop.xlane.xlu0 %1098
    %v1100 = vsel %vm53, %v1088, -inf
    %1101 = vmax.xlane.f32.xlu0 %v1100
    %v1102 = vpop.xlane.xlu0 %1101
    %v1103 = vsub.f32 %v1073, %v1093
    %v1104 = vsub.f32 %v1078, %v1096
    %v1105 = vsub.f32 %v1083, %v1099
    %v1106 = vsub.f32 %v1088, %v1102
    %v1107 = vmul.f32 %v1103, 1.442695
    %v1108 = vpow.pop %v1107
    %v1109 = vmul.f32 %v1104, 1.442695
    %v1110 = vpow.pop %v1109
    %v1111 = vmul.f32 %v1105, 1.442695
    %v1112 = vpow.pop %v1111
    %v1113 = vmul.f32 %v1106, 1.442695
    %v1114 = vpow.pop %v1113
    %v1115 = vsel %vm53, %v1108, 0.0
    %1116 = vadd.xlane.f32.xlu0 %v1115
    %v1117 = vpop.xlane.xlu0 %1116
    %v1118 = vsel %vm53, %v1110, 0.0
    %1119 = vadd.xlane.f32.xlu0 %v1118
    %v1120 = vpop.xlane.xlu0 %1119
    %v1121 = vsel %vm53, %v1112, 0.0
    %1122 = vadd.xlane.f32.xlu0 %v1121
    %v1123 = vpop.xlane.xlu0 %1122
    %v1124 = vsel %vm53, %v1114, 0.0
    %1125 = vadd.xlane.f32.xlu0 %v1124
    %v1126 = vpop.xlane.xlu0 %1125
    %v1127 = vrcp.pop %v1117
    %v1128 = vrcp.pop %v1120
    %v1129 = vrcp.pop %v1123
    %v1130 = vrcp.pop %v1126
    %v1131 = vmul.f32 %v1108, %v1127
    %v1132 = vmul.f32 %v1110, %v1128
    %v1133 = vmul.f32 %v1112, %v1129
    %v1134 = vmul.f32 %v1114, %v1130
    %1135 = vrot.lane.b32.xlu0 %v968, 96
    %v1136 = vpop.permute.xlu0 %1135
    %1137 = vrot.lane.b32.xlu0 %v978, 96
    %v1138 = vpop.permute.xlu0 %1137
    %1139 = vrot.lane.b32.xlu0 %v973, 96
    %v1140 = vpop.permute.xlu0 %1139
    %1141 = vrot.lane.b32.xlu0 %v981, 96
    %v1142 = vpop.permute.xlu0 %1141
    %v1148 = vsel %vm53, %v1131, 0
    %v1151 = vsel %vm53, %v1132, 0
    %v1154 = vsel %vm53, %v1133, 0
    %v1157 = vsel %vm53, %v1134, 0
    %1159 = vmatprep.subr.mxu0 0.0
    %1160 = vmatpush1.msra.mxu0 %v1136
    %1161 = vmatprep.subr.mxu0 0.0
    %1162 = vmatpush1.msra.mxu0 %v1138
    %1163 = vmatprep.subr.mxu0 0.0
    %1164 = vmatpush1.msra.mxu0 %v1140
    %1165 = vmatprep.subr.mxu0 0.0
    %1166 = vmatpush1.msra.mxu0 %v1142
    %1167 = vmatprep.subr.mxu0 0.0
    %1168 = vmatpush1.msra.mxu0 0.0
    %1169 = vmatprep.subr.mxu0 0.0
    %1170 = vmatpush1.msra.mxu0 0.0
    %1171 = vmatprep.subr.mxu0 0.0
    %1172 = vmatpush1.msra.mxu0 0.0
    %1173 = vmatprep.subr.mxu0 0.0
    %1174 = vmatpush1.msra.mxu0 0.0
    %1175 = vmatprep.subr.mxu0 0.0
    %1176 = vmatpush1.msra.mxu0 0.0
    %1177 = vmatprep.subr.mxu0 0.0
    %1178 = vmatpush1.msra.mxu0 0.0
    %1179 = vmatprep.subr.mxu0 0.0
    %1180 = vmatpush1.msra.mxu0 0.0
    %1181 = vmatprep.subr.mxu0 0.0
    %1182 = vmatpush1.msra.mxu0 0.0
    %1183 = vmatprep.subr.mxu0 0.0
    %1184 = vmatpush1.msra.mxu0 0.0
    %1185 = vmatprep.subr.mxu0 0.0
    %1186 = vmatpush1.msra.mxu0 0.0
    %1187 = vmatprep.subr.mxu0 0.0
    %1188 = vmatpush1.msra.mxu0 0.0
    %1189 = vmatprep.subr.mxu0 0.0
    %1190 = vmatpush1.msra.mxu0 0.0
    %1191 = vmatprep.subr.mxu0 0.0
    %1192 = vmatpush1.msra.mxu0 0.0
    %1193 = vmatprep.subr.mxu0 0.0
    %1194 = vmatpush1.msra.mxu0 0.0
    %1195 = vmatprep.subr.mxu0 0.0
    %1196 = vmatpush1.msra.mxu0 0.0
    %1197 = vmatprep.subr.mxu0 0.0
    %1198 = vmatpush1.msra.mxu0 0.0
    %1199 = vmatprep.subr.mxu0 0.0
    %1200 = vmatpush1.msra.mxu0 0.0
    %1201 = vmatprep.subr.mxu0 0.0
    %1202 = vmatpush1.msra.mxu0 0.0
    %1203 = vmatprep.subr.mxu0 0.0
    %1204 = vmatpush1.msra.mxu0 0.0
    %1205 = vmatprep.subr.mxu0 0.0
    %1206 = vmatpush1.msra.mxu0 0.0
    %1207 = vmatprep.subr.mxu0 0.0
    %1208 = vmatpush1.msra.mxu0 0.0
    %1209 = vmatprep.subr.mxu0 0.0
    %1210 = vmatpush1.msra.mxu0 0.0
    %1211 = vmatprep.subr.mxu0 0.0
    %1212 = vmatpush1.msra.mxu0 0.0
    %1213 = vmatprep.subr.mxu0 0.0
    %1214 = vmatpush1.msra.mxu0 0.0
    %1215 = vmatprep.subr.mxu0 0.0
    %1216 = vmatpush1.msra.mxu0 0.0
    %1217 = vmatprep.subr.mxu0 0.0
    %1218 = vmatpush1.msra.mxu0 0.0
    %1219 = vmatprep.subr.mxu0 0.0
    %1220 = vmatpush1.msra.mxu0 0.0
    %1221 = vmatprep.subr.mxu0 0.0
    %1222 = vmatpush1.msra.mxu0 0.0
    %1223 = vmatprep.mubr.f32.mxu0 0.0
    %1224 = vmatmul.mubr.f32.gmra.mrb[0].mxu0 %v1148
    %v1225 = vpop.f32.mrb[0].mxu0
    %v1226 = vadd.f32 0.0, %v1225
    %v1227 = vpop.f32.mrb[0].mxu0
    %1228 = vmatprep.mubr.f32.mxu0 0.0
    %1229 = vmatmul.mubr.f32.gmra.mrb[0].mxu0 %v1151
    %v1230 = vpop.f32.mrb[0].mxu0
    %v1231 = vadd.f32 0.0, %v1230
    %v1232 = vpop.f32.mrb[0].mxu0
    %1233 = vmatprep.mubr.f32.mxu0 0.0
    %1234 = vmatmul.mubr.f32.gmra.mrb[0].mxu0 %v1154
    %v1235 = vpop.f32.mrb[0].mxu0
    %v1236 = vadd.f32 0.0, %v1235
    %v1237 = vpop.f32.mrb[0].mxu0
    %1238 = vmatprep.mubr.f32.mxu0 0.0
    %1239 = vmatmul.mubr.f32.gmra.mrb[0].mxu0 %v1157
    %v1240 = vpop.f32.mrb[0].mxu0
    %v1241 = vadd.f32 0.0, %v1240
    %v1242 = vpop.f32.mrb[0].mxu0
    %1243 = vdwg.mxu0
    %1245 = vrot.lane.b32.xlu0 %v1231, 16
    %v1246 = vpop.permute.xlu0 %1245
    %v1248 = vsel %vm224, %v1226, %v1246
    %1250 = vrot.lane.b32.xlu0 %v1241, 16
    %v1251 = vpop.permute.xlu0 %1250
    %v1253 = vsel %vm224, %v1236, %v1251
    %v1254 = vlaneseq
    %v1255 = vshrl.u32 %v1254, 7
    %v1256 = vsub.s32 0, %v1255
    %v1257 = vrot.slane %v868, %v1256
    %1262 = vrot.lane.b32.xlu0 %v875, 32
    %v1263 = vpop.permute.xlu0 %1262
    %1264 = vrot.lane.b32.xlu0 %v876, 32
    %v1265 = vpop.permute.xlu0 %1264
    %1266 = vrot.lane.b32.xlu0 %v877, 32
    %v1267 = vpop.permute.xlu0 %1266
    %1268 = vrot.lane.b32.xlu0 %v878, 32
    %v1269 = vpop.permute.xlu0 %1268
    %v1275 = vsel %vm53, %v1248, 0
    %v1278 = vsel %vm53, %v1253, 0
    %1280 = vmatprep.subr.mxu0 0.0
    %1281 = vmatpush1.msra.mxu0 %v1263
    %1282 = vmatprep.subr.mxu0 0.0
    %1283 = vmatpush1.msra.mxu0 %v1265
    %1284 = vmatprep.subr.mxu0 0.0
    %1285 = vmatpush1.msra.mxu0 %v1267
    %1286 = vmatprep.subr.mxu0 0.0
    %1287 = vmatpush1.msra.mxu0 %v1269
    %1288 = vmatprep.subr.mxu0 0.0
    %1289 = vmatpush1.msra.mxu0 0.0
    %1290 = vmatprep.subr.mxu0 0.0
    %1291 = vmatpush1.msra.mxu0 0.0
    %1292 = vmatprep.subr.mxu0 0.0
    %1293 = vmatpush1.msra.mxu0 0.0
    %1294 = vmatprep.subr.mxu0 0.0
    %1295 = vmatpush1.msra.mxu0 0.0
    %1296 = vmatprep.subr.mxu0 0.0
    %1297 = vmatpush1.msra.mxu0 0.0
    %1298 = vmatprep.subr.mxu0 0.0
    %1299 = vmatpush1.msra.mxu0 0.0
    %1300 = vmatprep.subr.mxu0 0.0
    %1301 = vmatpush1.msra.mxu0 0.0
    %1302 = vmatprep.subr.mxu0 0.0
    %1303 = vmatpush1.msra.mxu0 0.0
    %1304 = vmatprep.subr.mxu0 0.0
    %1305 = vmatpush1.msra.mxu0 0.0
    %1306 = vmatprep.subr.mxu0 0.0
    %1307 = vmatpush1.msra.mxu0 0.0
    %1308 = vmatprep.subr.mxu0 0.0
    %1309 = vmatpush1.msra.mxu0 0.0
    %1310 = vmatprep.subr.mxu0 0.0
    %1311 = vmatpush1.msra.mxu0 0.0
    %1312 = vmatprep.subr.mxu0 0.0
    %1313 = vmatpush1.msra.mxu0 0.0
    %1314 = vmatprep.subr.mxu0 0.0
    %1315 = vmatpush1.msra.mxu0 0.0
    %1316 = vmatprep.subr.mxu0 0.0
    %1317 = vmatpush1.msra.mxu0 0.0
    %1318 = vmatprep.subr.mxu0 0.0
    %1319 = vmatpush1.msra.mxu0 0.0
    %1320 = vmatprep.subr.mxu0 0.0
    %1321 = vmatpush1.msra.mxu0 0.0
    %1322 = vmatprep.subr.mxu0 0.0
    %1323 = vmatpush1.msra.mxu0 0.0
    %1324 = vmatprep.subr.mxu0 0.0
    %1325 = vmatpush1.msra.mxu0 0.0
    %1326 = vmatprep.subr.mxu0 0.0
    %1327 = vmatpush1.msra.mxu0 0.0
    %1328 = vmatprep.subr.mxu0 0.0
    %1329 = vmatpush1.msra.mxu0 0.0
    %1330 = vmatprep.subr.mxu0 0.0
    %1331 = vmatpush1.msra.mxu0 0.0
    %1332 = vmatprep.subr.mxu0 0.0
    %1333 = vmatpush1.msra.mxu0 0.0
    %1334 = vmatprep.subr.mxu0 0.0
    %1335 = vmatpush1.msra.mxu0 0.0
    %1336 = vmatprep.subr.mxu0 0.0
    %1337 = vmatpush1.msra.mxu0 0.0
    %1338 = vmatprep.subr.mxu0 0.0
    %1339 = vmatpush1.msra.mxu0 0.0
    %1340 = vmatprep.subr.mxu0 0.0
    %1341 = vmatpush1.msra.mxu0 0.0
    %1342 = vmatprep.subr.mxu0 0.0
    %1343 = vmatpush1.msra.mxu0 0.0
    %1344 = vmatprep.mubr.f32.mxu0 0.0
    %1345 = vmatmul.mubr.f32.gmra.mrb[0].mxu0 %v1275
    %v1346 = vpop.f32.mrb[0].mxu0
    %v1347 = vadd.f32 %v1257, %v1346
    %v1348 = vpop.f32.mrb[0].mxu0
    %1349 = vmatprep.mubr.f32.mxu0 0.0
    %1350 = vmatmul.mubr.f32.gmra.mrb[0].mxu0 %v1278
    %v1351 = vpop.f32.mrb[0].mxu0
    %v1352 = vadd.f32 %v1257, %v1351
    %v1353 = vpop.f32.mrb[0].mxu0
    %1354 = vdwg.mxu0
    %v1355 = vadd.f32 %v1347, %v865
    %v1356 = vadd.f32 %v1352, %v866
    %v1357 = vsel %vm53, %v1355, 0.0
    %1358 = vadd.xlane.f32.xlu0 %v1357
    %v1359 = vpop.xlane.xlu0 %1358
    %v1360 = vsel %vm53, %v1356, 0.0
    %1361 = vadd.xlane.f32.xlu0 %v1360
    %v1362 = vpop.xlane.xlu0 %1361
    %v1363 = vmul.f32 %v1359, %v60
    %v1364 = vmul.f32 %v1362, %v60
    %v1365 = vmul.f32 %v1355, %v1355
    %v1366 = vmul.f32 %v1356, %v1356
    %v1367 = vsel %vm53, %v1365, 0.0
    %1368 = vadd.xlane.f32.xlu0 %v1367
    %v1369 = vpop.xlane.xlu0 %1368
    %v1370 = vsel %vm53, %v1366, 0.0
    %1371 = vadd.xlane.f32.xlu0 %v1370
    %v1372 = vpop.xlane.xlu0 %1371
    %v1373 = vmul.f32 %v1369, %v60
    %v1374 = vmul.f32 %v1372, %v60
    %v1375 = vmul.f32 %v1363, %v1363
    %v1376 = vmul.f32 %v1364, %v1364
    %v1377 = vsub.f32 %v1373, %v1375
    %v1378 = vsub.f32 %v1374, %v1376
    %v1379 = vsub.f32 %v1355, %v1363
    %v1380 = vsub.f32 %v1356, %v1364
    %v1381 = vadd.f32 %v1377, 1e-12
    %v1382 = vadd.f32 %v1378, 1e-12
    %v1383 = vrsqrt.pop %v1381
    %v1384 = vrsqrt.pop %v1382
    %v1385 = vmul.f32 %v1379, %v1383
    %v1386 = vmul.f32 %v1380, %v1384
    %v1387 = vlaneseq
    %v1388 = vshrl.u32 %v1387, 7
    %v1389 = vsub.s32 0, %v1388
    %v1390 = vrot.slane %v869, %v1389
    %v1391 = vmul.f32 %v1385, %v1390
    %v1392 = vmul.f32 %v1386, %v1390
    %v1393 = vlaneseq
    %v1394 = vshrl.u32 %v1393, 7
    %v1395 = vsub.s32 0, %v1394
    %v1396 = vrot.slane %v870, %v1395
    %v1397 = vadd.f32 %v1391, %v1396
    %v1398 = vadd.f32 %v1392, %v1396
    %v1399 = vlaneseq
    %v1400 = vshrl.u32 %v1399, 7
    %v1401 = vsub.s32 0, %v1400
    %v1402 = vrot.slane %v871, %v1401
    %v1404 = vsel %vm53, %v1397, 0
    %v1407 = vsel %vm53, %v1398, 0
    %1409 = vmatprep.subr.mxu0 0.0
    %1410 = vmatpush1.msra.mxu0 %v879
    %1411 = vmatprep.subr.mxu0 0.0
    %1412 = vmatpush1.msra.mxu0 %v880
    %1413 = vmatprep.subr.mxu0 0.0
    %1414 = vmatpush1.msra.mxu0 %v881
    %1415 = vmatprep.subr.mxu0 0.0
    %1416 = vmatpush1.msra.mxu0 %v882
    %1417 = vmatprep.subr.mxu0 0.0
    %1418 = vmatpush1.msra.mxu0 0.0
    %1419 = vmatprep.subr.mxu0 0.0
    %1420 = vmatpush1.msra.mxu0 0.0
    %1421 = vmatprep.subr.mxu0 0.0
    %1422 = vmatpush1.msra.mxu0 0.0
    %1423 = vmatprep.subr.mxu0 0.0
    %1424 = vmatpush1.msra.mxu0 0.0
    %1425 = vmatprep.subr.mxu0 0.0
    %1426 = vmatpush1.msra.mxu0 0.0
    %1427 = vmatprep.subr.mxu0 0.0
    %1428 = vmatpush1.msra.mxu0 0.0
    %1429 = vmatprep.subr.mxu0 0.0
    %1430 = vmatpush1.msra.mxu0 0.0
    %1431 = vmatprep.subr.mxu0 0.0
    %1432 = vmatpush1.msra.mxu0 0.0
    %1433 = vmatprep.subr.mxu0 0.0
    %1434 = vmatpush1.msra.mxu0 0.0
    %1435 = vmatprep.subr.mxu0 0.0
    %1436 = vmatpush1.msra.mxu0 0.0
    %1437 = vmatprep.subr.mxu0 0.0
    %1438 = vmatpush1.msra.mxu0 0.0
    %1439 = vmatprep.subr.mxu0 0.0
    %1440 = vmatpush1.msra.mxu0 0.0
    %1441 = vmatprep.subr.mxu0 0.0
    %1442 = vmatpush1.msra.mxu0 0.0
    %1443 = vmatprep.subr.mxu0 0.0
    %1444 = vmatpush1.msra.mxu0 0.0
    %1445 = vmatprep.subr.mxu0 0.0
    %1446 = vmatpush1.msra.mxu0 0.0
    %1447 = vmatprep.subr.mxu0 0.0
    %1448 = vmatpush1.msra.mxu0 0.0
    %1449 = vmatprep.subr.mxu0 0.0
    %1450 = vmatpush1.msra.mxu0 0.0
    %1451 = vmatprep.subr.mxu0 0.0
    %1452 = vmatpush1.msra.mxu0 0.0
    %1453 = vmatprep.subr.mxu0 0.0
    %1454 = vmatpush1.msra.mxu0 0.0
    %1455 = vmatprep.subr.mxu0 0.0
    %1456 = vmatpush1.msra.mxu0 0.0
    %1457 = vmatprep.subr.mxu0 0.0
    %1458 = vmatpush1.msra.mxu0 0.0
    %1459 = vmatprep.subr.mxu0 0.0
    %1460 = vmatpush1.msra.mxu0 0.0
    %1461 = vmatprep.subr.mxu0 0.0
    %1462 = vmatpush1.msra.mxu0 0.0
    %1463 = vmatprep.subr.mxu0 0.0
    %1464 = vmatpush1.msra.mxu0 0.0
    %1465 = vmatprep.subr.mxu0 0.0
    %1466 = vmatpush1.msra.mxu0 0.0
    %1467 = vmatprep.subr.mxu0 0.0
    %1468 = vmatpush1.msra.mxu0 0.0
    %1469 = vmatprep.subr.mxu0 0.0
    %1470 = vmatpush1.msra.mxu0 0.0
    %1471 = vmatprep.subr.mxu0 0.0
    %1472 = vmatpush1.msra.mxu0 0.0
    %1473 = vmatprep.mubr.f32.mxu0 0.0
    %1474 = vmatmul.mubr.f32.gmra.mrb[0].mxu0 %v1404
    %v1475 = vpop.f32.mrb[0].mxu0
    %v1476 = vadd.f32 %v1402, %v1475
    %v1477 = vpop.f32.mrb[0].mxu0
    %1478 = vmatprep.mubr.f32.mxu0 0.0
    %1479 = vmatmul.mubr.f32.gmra.mrb[0].mxu0 %v1407
    %v1480 = vpop.f32.mrb[0].mxu0
    %v1481 = vadd.f32 %v1402, %v1480
    %v1482 = vpop.f32.mrb[0].mxu0
    %1483 = vdwg.mxu0
    %v1484 = vmul.f32 %v1476, %v1476
    %v1485 = vmul.f32 %v1481, %v1481
    %v1486 = vmul.f32 %v1476, %v1484
    %v1487 = vmul.f32 %v1481, %v1485
    %v1488 = vmul.f32 %v1486, 0.044715
    %v1489 = vmul.f32 %v1487, 0.044715
    %v1490 = vadd.f32 %v1476, %v1488
    %v1491 = vadd.f32 %v1481, %v1489
    %v1492 = vmul.f32 %v1490, 0.7978846
    %v1493 = vmul.f32 %v1491, 0.7978846
    %v1494 = vtanh.pop %v1492
    %v1495 = vtanh.pop %v1493
    %v1496 = vadd.f32 %v1494, 1.0
    %v1497 = vadd.f32 %v1495, 1.0
    %v1498 = vmul.f32 %v1496, 0.5
    %v1499 = vmul.f32 %v1497, 0.5
    %v1500 = vmul.f32 %v1476, %v1498
    %v1501 = vmul.f32 %v1481, %v1499
    %v1502 = vlaneseq
    %v1503 = vshrl.u32 %v1502, 7
    %v1504 = vsub.s32 0, %v1503
    %v1505 = vrot.slane %v872, %v1504
    %v1507 = vsel %vm741, %v1500, 0
    %v1510 = vsel %vm741, %v1501, 0
    %1512 = vmatprep.subr.mxu0 0.0
    %1513 = vmatpush1.msra.mxu0 %v883
    %1514 = vmatprep.subr.mxu0 0.0
    %1515 = vmatpush1.msra.mxu0 %v884
    %1516 = vmatprep.subr.mxu0 0.0
    %1517 = vmatpush1.msra.mxu0 %v885
    %1518 = vmatprep.subr.mxu0 0.0
    %1519 = vmatpush1.msra.mxu0 %v886
    %1520 = vmatprep.subr.mxu0 0.0
    %1521 = vmatpush1.msra.mxu0 %v887
    %1522 = vmatprep.subr.mxu0 0.0
    %1523 = vmatpush1.msra.mxu0 %v888
    %1524 = vmatprep.subr.mxu0 0.0
    %1525 = vmatpush1.msra.mxu0 %v889
    %1526 = vmatprep.subr.mxu0 0.0
    %1527 = vmatpush1.msra.mxu0 %v890
    %1528 = vmatprep.subr.mxu0 0.0
    %1529 = vmatpush1.msra.mxu0 0.0
    %1530 = vmatprep.subr.mxu0 0.0
    %1531 = vmatpush1.msra.mxu0 0.0
    %1532 = vmatprep.subr.mxu0 0.0
    %1533 = vmatpush1.msra.mxu0 0.0
    %1534 = vmatprep.subr.mxu0 0.0
    %1535 = vmatpush1.msra.mxu0 0.0
    %1536 = vmatprep.subr.mxu0 0.0
    %1537 = vmatpush1.msra.mxu0 0.0
    %1538 = vmatprep.subr.mxu0 0.0
    %1539 = vmatpush1.msra.mxu0 0.0
    %1540 = vmatprep.subr.mxu0 0.0
    %1541 = vmatpush1.msra.mxu0 0.0
    %1542 = vmatprep.subr.mxu0 0.0
    %1543 = vmatpush1.msra.mxu0 0.0
    %1544 = vmatprep.subr.mxu0 0.0
    %1545 = vmatpush1.msra.mxu0 0.0
    %1546 = vmatprep.subr.mxu0 0.0
    %1547 = vmatpush1.msra.mxu0 0.0
    %1548 = vmatprep.subr.mxu0 0.0
    %1549 = vmatpush1.msra.mxu0 0.0
    %1550 = vmatprep.subr.mxu0 0.0
    %1551 = vmatpush1.msra.mxu0 0.0
    %1552 = vmatprep.subr.mxu0 0.0
    %1553 = vmatpush1.msra.mxu0 0.0
    %1554 = vmatprep.subr.mxu0 0.0
    %1555 = vmatpush1.msra.mxu0 0.0
    %1556 = vmatprep.subr.mxu0 0.0
    %1557 = vmatpush1.msra.mxu0 0.0
    %1558 = vmatprep.subr.mxu0 0.0
    %1559 = vmatpush1.msra.mxu0 0.0
    %1560 = vmatprep.subr.mxu0 0.0
    %1561 = vmatpush1.msra.mxu0 0.0
    %1562 = vmatprep.subr.mxu0 0.0
    %1563 = vmatpush1.msra.mxu0 0.0
    %1564 = vmatprep.subr.mxu0 0.0
    %1565 = vmatpush1.msra.mxu0 0.0
    %1566 = vmatprep.subr.mxu0 0.0
    %1567 = vmatpush1.msra.mxu0 0.0
    %1568 = vmatprep.subr.mxu0 0.0
    %1569 = vmatpush1.msra.mxu0 0.0
    %1570 = vmatprep.subr.mxu0 0.0
    %1571 = vmatpush1.msra.mxu0 0.0
    %1572 = vmatprep.subr.mxu0 0.0
    %1573 = vmatpush1.msra.mxu0 0.0
    %1574 = vmatprep.subr.mxu0 0.0
    %1575 = vmatpush1.msra.mxu0 0.0
    %1576 = vmatprep.mubr.f32.mxu0 0.0
    %1577 = vmatmul.mubr.f32.gmra.mrb[0].mxu0 %v1507
    %v1578 = vpop.f32.mrb[0].mxu0
    %v1579 = vadd.f32 %v1505, %v1578
    %v1580 = vpop.f32.mrb[0].mxu0
    %1581 = vmatprep.mubr.f32.mxu0 0.0
    %1582 = vmatmul.mubr.f32.gmra.mrb[0].mxu0 %v1510
    %v1583 = vpop.f32.mrb[0].mxu0
    %v1584 = vadd.f32 %v1505, %v1583
    %v1585 = vpop.f32.mrb[0].mxu0
    %1586 = vdwg.mxu0
    %v1587 = vadd.f32 %v1579, %v1397
    %v1588 = vadd.f32 %v1584, %v1398
    %v1589 = vsel %vm53, %v1587, 0.0
    %1590 = vadd.xlane.f32.xlu0 %v1589
    %v1591 = vpop.xlane.xlu0 %1590
    %v1592 = vsel %vm53, %v1588, 0.0
    %1593 = vadd.xlane.f32.xlu0 %v1592
    %v1594 = vpop.xlane.xlu0 %1593
    %v1595 = vmul.f32 %v1591, %v60
    %v1596 = vmul.f32 %v1594, %v60
    %v1597 = vmul.f32 %v1587, %v1587
    %v1598 = vmul.f32 %v1588, %v1588
    %v1599 = vsel %vm53, %v1597, 0.0
    %1600 = vadd.xlane.f32.xlu0 %v1599
    %v1601 = vpop.xlane.xlu0 %1600
    %v1602 = vsel %vm53, %v1598, 0.0
    %1603 = vadd.xlane.f32.xlu0 %v1602
    %v1604 = vpop.xlane.xlu0 %1603
    %v1605 = vmul.f32 %v1601, %v60
    %v1606 = vmul.f32 %v1604, %v60
    %v1607 = vmul.f32 %v1595, %v1595
    %v1608 = vmul.f32 %v1596, %v1596
    %v1609 = vsub.f32 %v1605, %v1607
    %v1610 = vsub.f32 %v1606, %v1608
    %v1611 = vsub.f32 %v1587, %v1595
    %v1612 = vsub.f32 %v1588, %v1596
    %v1613 = vadd.f32 %v1609, 1e-12
    %v1614 = vadd.f32 %v1610, 1e-12
    %v1615 = vrsqrt.pop %v1613
    %v1616 = vrsqrt.pop %v1614
    %v1617 = vmul.f32 %v1611, %v1615
    %v1618 = vmul.f32 %v1612, %v1616
    %v1619 = vlaneseq
    %v1620 = vshrl.u32 %v1619, 7
    %v1621 = vsub.s32 0, %v1620
    %v1622 = vrot.slane %v873, %v1621
    %v1623 = vmul.f32 %v1617, %v1622
    %v1624 = vmul.f32 %v1618, %v1622
    %v1625 = vlaneseq
    %v1626 = vshrl.u32 %v1625, 7
    %v1627 = vsub.s32 0, %v1626
    %v1628 = vrot.slane %v874, %v1627
    %v1629 = vadd.f32 %v1623, %v1628
    %v1630 = vadd.f32 %v1624, %v1628
    %v1631 = vld [vmem:[#allocation5 + $0x18] sm:$0xff]
    %v1632 = vld [vmem:[#allocation5 + $0x20] sm:$0xff]
    %v1633 = vld [vmem:[#allocation5 + $0x28] sm:$0xff]
    %v1634 = vld [vmem:[#allocation5 + $0x30] sm:$0xff]
    %v1635 = vld [vmem:[#allocation5 + $0x12] sm:$0x1]
    %v1636 = vlaneseq
    %v1637 = vshrl.u32 %v1636, 7
    %v1638 = vsub.s32 0, %v1637
    %v1639 = vrot.slane %v1635, %v1638
    %v1641 = vsel %vm53, %v1629, 0
    %v1644 = vsel %vm53, %v1630, 0
    %1646 = vmatprep.subr.mxu0 0.0
    %1647 = vmatpush1.msra.mxu0 %v1631
    %1648 = vmatprep.subr.mxu0 0.0
    %1649 = vmatpush1.msra.mxu0 %v1632
    %1650 = vmatprep.subr.mxu0 0.0
    %1651 = vmatpush1.msra.mxu0 %v1633
    %1652 = vmatprep.subr.mxu0 0.0
    %1653 = vmatpush1.msra.mxu0 %v1634
    %1654 = vmatprep.subr.mxu0 0.0
    %1655 = vmatpush1.msra.mxu0 0.0
    %1656 = vmatprep.subr.mxu0 0.0
    %1657 = vmatpush1.msra.mxu0 0.0
    %1658 = vmatprep.subr.mxu0 0.0
    %1659 = vmatpush1.msra.mxu0 0.0
    %1660 = vmatprep.subr.mxu0 0.0
    %1661 = vmatpush1.msra.mxu0 0.0
    %1662 = vmatprep.subr.mxu0 0.0
    %1663 = vmatpush1.msra.mxu0 0.0
    %1664 = vmatprep.subr.mxu0 0.0
    %1665 = vmatpush1.msra.mxu0 0.0
    %1666 = vmatprep.subr.mxu0 0.0
    %1667 = vmatpush1.msra.mxu0 0.0
    %1668 = vmatprep.subr.mxu0 0.0
    %1669 = vmatpush1.msra.mxu0 0.0
    %1670 = vmatprep.subr.mxu0 0.0
    %1671 = vmatpush1.msra.mxu0 0.0
    %1672 = vmatprep.subr.mxu0 0.0
    %1673 = vmatpush1.msra.mxu0 0.0
    %1674 = vmatprep.subr.mxu0 0.0
    %1675 = vmatpush1.msra.mxu0 0.0
    %1676 = vmatprep.subr.mxu0 0.0
    %1677 = vmatpush1.msra.mxu0 0.0
    %1678 = vmatprep.subr.mxu0 0.0
    %1679 = vmatpush1.msra.mxu0 0.0
    %1680 = vmatprep.subr.mxu0 0.0
    %1681 = vmatpush1.msra.mxu0 0.0
    %1682 = vmatprep.subr.mxu0 0.0
    %1683 = vmatpush1.msra.mxu0 0.0
    %1684 = vmatprep.subr.mxu0 0.0
    %1685 = vmatpush1.msra.mxu0 0.0
    %1686 = vmatprep.subr.mxu0 0.0
    %1687 = vmatpush1.msra.mxu0 0.0
    %1688 = vmatprep.subr.mxu0 0.0
    %1689 = vmatpush1.msra.mxu0 0.0
    %1690 = vmatprep.subr.mxu0 0.0
    %1691 = vmatpush1.msra.mxu0 0.0
    %1692 = vmatprep.subr.mxu0 0.0
    %1693 = vmatpush1.msra.mxu0 0.0
    %1694 = vmatprep.subr.mxu0 0.0
    %1695 = vmatpush1.msra.mxu0 0.0
    %1696 = vmatprep.subr.mxu0 0.0
    %1697 = vmatpush1.msra.mxu0 0.0
    %1698 = vmatprep.subr.mxu0 0.0
    %1699 = vmatpush1.msra.mxu0 0.0
    %1700 = vmatprep.subr.mxu0 0.0
    %1701 = vmatpush1.msra.mxu0 0.0
    %1702 = vmatprep.subr.mxu0 0.0
    %1703 = vmatpush1.msra.mxu0 0.0
    %1704 = vmatprep.subr.mxu0 0.0
    %1705 = vmatpush1.msra.mxu0 0.0
    %1706 = vmatprep.subr.mxu0 0.0
    %1707 = vmatpush1.msra.mxu0 0.0
    %1708 = vmatprep.subr.mxu0 0.0
    %1709 = vmatpush1.msra.mxu0 0.0
    %1710 = vmatprep.mubr.f32.mxu0 0.0
    %1711 = vmatmul.mubr.f32.gmra.mrb[0].mxu0 %v1641
    %v1712 = vpop.f32.mrb[0].mxu0
    %v1713 = vadd.f32 %v1639, %v1712
    %v1714 = vpop.f32.mrb[0].mxu0
    %1715 = vmatprep.mubr.f32.mxu0 0.0
    %1716 = vmatmul.mubr.f32.gmra.mrb[0].mxu0 %v1644
    %v1717 = vpop.f32.mrb[0].mxu0
    %v1718 = vadd.f32 %v1639, %v1717
    %v1719 = vpop.f32.mrb[0].mxu0
    %1720 = vdwg.mxu0
    %1721 = vst [vmem:[#allocation7] sm:$0xff] %v1713
    %1722 = vst [vmem:[#allocation7 + $0x8] sm:$0xff] %v1718
    // Predicated region
    $region30: #{tpu_custom_call.1} parent=1 // pred_check
      _
    $region31: #{tpu_custom_call.1} parent=1 // pred_check_branch
      %1724 = sbr.rel (0) target = $region33
    $region32: #{tpu_custom_call.1} parent=1 // pred_region
      %s1726 = ssub.s32 256, 256
      %1727 = vsyncadd [#allocation4], %s1726
      %s1728 = sshll.u32 [#allocation7], 4
      %s1729 = int_to_ptr.vmem [resolvable:$true] %s1728
      %1734 = dma.vmem_to_hbm [thread:$0]  %s1729, 256, %s5, [#allocation4], 128, 128, 8
    $region33: #{tpu_custom_call.1} parent=1 // pred_fallthru
      _
    // Predicated region
    $region34: #{tpu_custom_call.1} parent=1 // pred_check
      _
    $region35: #{tpu_custom_call.1} parent=1 // pred_check_branch
      %1736 = sbr.rel (0) target = $region37
    $region36: #{tpu_custom_call.1} parent=1 // pred_region
      %1737 = dma.done [#allocation4], 256
    $region37: #{tpu_custom_call.1} parent=1 // pred_fallthru
      _
    %1738 = vsyncpa [#allocation3], 1
    %1739 = vsyncpa [#allocation6], 1
    %1740 = vsyncpa [#allocation4], 1

</llo_original>
